<compile_context>
chip_gen: v5e
topology: v5e:2x2
jax: 0.10.0
libtpu: 0.0.40
codegen_flags: <defaults>
</compile_context>

<pallas_src>
import functools

import jax
import jax.numpy as jnp
from jax.experimental import pallas as pl
from jax.experimental.pallas import tpu as pltpu


H1, H2, H3 = 256, 128, 1


def _disc_kernel(x_ref, w1_ref, b1_ref, w2_ref, b2_ref, w3_ref, b3_ref, o_ref):
    # ---- Layer 1: Linear(D, 256) + LeakyReLU(0.2), feature-major -------------
    # Transpose only the small [TB, D] x tile (f32 XLU transpose, D*TB*4 bytes),
    # cast to bf16 in-register, then feed the MXU with w1 [256, D] stationary.
    xt = x_ref[...].T.astype(jnp.bfloat16)                       # [D, TB] bf16
    h1t = jnp.dot(w1_ref[...], xt,
                  preferred_element_type=jnp.float32)            # [256, TB] f32
    # Bias + LeakyReLU in bf16 (operands already bf16-rounded; also the dtype
    # layer 2 consumes, so no separate astype pass).
    h1t = h1t.astype(jnp.bfloat16) + b1_ref[...]                 # [256,1] lane-bcast
    h1t = jnp.maximum(h1t, 0.2 * h1t)                            # one vmax

    # ---- Layer 2: Linear(256, 128) + LeakyReLU(0.2) ---------------------------
    h2t = jnp.dot(w2_ref[...], h1t,
                  preferred_element_type=jnp.float32)            # [128, TB] f32
    h2t = h2t + b2_ref[...]                                      # [128,1] lane-bcast
    h2t = jnp.maximum(h2t, 0.2 * h2t)

    # ---- Layer 3: Linear(128, 1) + Sigmoid ------------------------------------
    # VPU multiply + sublane reduce instead of an N=1 MXU matmul; result is a
    # lane-dense [1, TB] row (batch on lanes) -> dense, unmasked store.
    logits = jnp.sum(h2t * w3_ref[...], axis=0, keepdims=True) + b3_ref[...]
    o_ref[...] = jax.nn.sigmoid(logits).astype(o_ref.dtype)


@functools.partial(jax.jit, static_argnames=("block_b",))
def discriminator_forward(x, kparams, block_b=None):
    """x: [B, input_dim] float32; kparams from `prepare_kernel_params`.

    Returns [B, 1] float32 in (0, 1)."""
    w1, b1, w2, b2, w3, b3 = kparams
    B, D = x.shape

    if block_b is None:
        # Big batch tiles amortize the ~0.35 us/step overhead (v5e/v6e single
        # TC), while >=2 grid steps keep both v7x TensorCores busy when B >= 512.
        half = -(-B // 2)
        half = -(-half // 8) * 8              # sublane multiple
        block_b = min(max(256, min(1024, half)), B)

    grid = (pl.cdiv(B, block_b),)
    const = lambda i: (0, 0)                  # weights: same block every step

    # VMEM budget: double-buffered x tile + resident weights + in-kernel
    # temporaries (x^T, h1 acc/bf16, h2t).  2x headroom, floor at the 32 MiB
    # scoped default, capped at v7x's 64 MiB physical VMEM per TensorCore.
    weight_bytes = ((H1 * D + H1) * 2                 # w1 + b1 (bf16)
                    + H2 * H1 * 2                     # w2 (bf16)
                    + (H2 + H2 + 1) * 4)              # b2 + w3 + b3 (f32)
    tmp_bytes = (block_b * D * (4 + 2)                # x^T f32 + bf16
                 + block_b * H1 * (4 + 2)             # layer-1 acc f32 + bf16 h1t
                 + block_b * H2 * 4                   # h2t f32
                 + block_b * 4 * 4)                   # logits / sigmoid slack
    vmem_est = (2 * block_b * D * 4                   # x tile, double-buffered, f32
                + 2 * block_b * 4                     # output row, double-buffered
                + 2 * weight_bytes                    # weight specs (double-buffered)
                + tmp_bytes)
    vmem_limit = int(min(max(2 * vmem_est, 32 * 1024 * 1024), 64 * 1024 * 1024))

    cost = pl.CostEstimate(
        flops=2 * B * (D * H1 + H1 * H2 + H2),
        transcendentals=B,                            # sigmoid exp
        bytes_accessed=(B * D * 4 + weight_bytes + B * 4))

    # TODO(synk): for very large input_dim (>~1024 on v7x, ~2048 on v5e/v6e),
    # add a K grid axis for layer 1 and mark the weight specs
    # pipeline_mode=pl.Buffered(1) to halve their (then non-trivial) VMEM cost.
    out_row = pl.pallas_call(
        _disc_kernel,
        out_shape=jax.ShapeDtypeStruct((1, B), jnp.float32),
        grid_spec=pltpu.PrefetchScalarGridSpec(
            num_scalar_prefetch=0,
            grid=grid,
            in_specs=[
                pl.BlockSpec((block_b, D), lambda i: (i, 0)),   # x tile (f32)
                pl.BlockSpec((H1, D), const),                   # w1  [256, D] bf16
                pl.BlockSpec((H1, 1), const),                   # b1  [256, 1] bf16
                pl.BlockSpec((H2, H1), const),                  # w2  [128, 256] bf16
                pl.BlockSpec((H2, 1), const),                   # b2  [128, 1] f32
                pl.BlockSpec((H2, 1), const),                   # w3  [128, 1] f32
                pl.BlockSpec((1, 1), const),                    # b3  [1, 1] f32
            ],
            out_specs=pl.BlockSpec((1, block_b), lambda i: (0, i)),
        ),
        compiler_params=pltpu.CompilerParams(
            dimension_semantics=("parallel",),
            vmem_limit_bytes=vmem_limit,
        ),
        cost_estimate=cost,
    )(x, w1, b1, w2, b2, w3, b3)

    # Lane-dense (1, B) row -> [B, 1] column (pure layout plumbing).
    return out_row.reshape(B, 1)


def init_params(key, input_dim):
    """PyTorch nn.Linear-style layout and U(-1/sqrt(fan_in), .) init, f32.

    Layout (out, in): w1 [256, D], b1 [256]; w2 [128, 256], b2 [128];
                      w3 [1, 128],  b3 [1].
    """
    def linear(k, fan_in, w_shape, b_shape):
        kw, kb = jax.random.split(k)
        bound = float(fan_in) ** -0.5
        w = jax.random.uniform(kw, w_shape, jnp.float32, -bound, bound)
        b = jax.random.uniform(kb, b_shape, jnp.float32, -bound, bound)
        return w, b

    k1, k2, k3 = jax.random.split(key, 3)
    w1, b1 = linear(k1, input_dim, (H1, input_dim), (H1,))
    w2, b2 = linear(k2, H1, (H2, H1), (H2,))
    w3, b3 = linear(k3, H2, (H3, H2), (H3,))
    return (w1, b1, w2, b2, w3, b3)


def prepare_kernel_params(params):
    """One-time conversion to kernel layout/dtypes (outside the per-call hot path)."""
    w1, b1, w2, b2, w3, b3 = params
    return (w1.astype(jnp.bfloat16),                  # [256, D]   bf16
            b1.reshape(-1, 1).astype(jnp.bfloat16),   # [256, 1]   bf16
            w2.astype(jnp.bfloat16),                  # [128, 256] bf16
            b2.reshape(-1, 1),                        # [128, 1]   f32
            w3.reshape(-1, 1),                        # [128, 1]   f32
            b3.reshape(1, 1))                         # [1, 1]     f32


def _reference_forward(x, params):
    """Pure-JAX f32 reference (PyTorch layout) for correctness checking."""
    w1, b1, w2, b2, w3, b3 = params
    h = x @ w1.T + b1
    h = jnp.where(h > 0, h, 0.2 * h)
    h = h @ w2.T + b2
    h = jnp.where(h > 0, h, 0.2 * h)
    h = h @ w3.T + b3
    return jax.nn.sigmoid(h)


if __name__ == "__main__":
    key = jax.random.PRNGKey(0)
    k_x, k_p = jax.random.split(key)

    batch = 512          # -> 2 batch tiles of 256 (both v7x TCs get work)
    input_dim = 32       # stands in for df.shape[1] from the CSV-derived input

    x = jax.random.normal(k_x, (batch, input_dim), jnp.float32)
    params = init_params(k_p, input_dim)
    kparams = prepare_kernel_params(params)   # bf16 weight conversion happens once

    out = discriminator_forward(x, kparams)
    out = jax.block_until_ready(out)

    ref = _reference_forward(x, params)
    assert out.shape == (batch, 1)
    # bf16 matmul operands / bf16 layer-1 elementwise -> loosened tolerance.
    assert jnp.allclose(out, ref, atol=2e-2, rtol=2e-2), "mismatch vs reference"

    print("KERNEL_OK")
</pallas_src>

<mosaic_0001>
module attributes {stable_mosaic.version = 11 : i64} {
  func.func @_disc_kernel(%arg0: i32, %arg1: memref<256x32xf32, #tpu.memory_space<vmem>>, %arg2: memref<256x32xbf16, #tpu.memory_space<vmem>>, %arg3: memref<256x1xbf16, #tpu.memory_space<vmem>>, %arg4: memref<128x256xbf16, #tpu.memory_space<vmem>>, %arg5: memref<128x1xf32, #tpu.memory_space<vmem>>, %arg6: memref<128x1xf32, #tpu.memory_space<vmem>>, %arg7: memref<1x1xf32, #tpu.memory_space<vmem>>, %arg8: memref<1x256xf32, #tpu.memory_space<vmem>>) attributes {dimension_semantics = [#tpu.dimension_semantics<parallel>], iteration_bounds = array<i64: 2>, scalar_prefetch = 0 : i64, scratch_operands = 0 : i64, tpu.core_type = #tpu.core_type<tc>, window_params = [{transform_indices = @transform_0, window_bounds = array<i64: 256, 32>}, {pipeline_mode = #tpu.pipeline_mode<synchronous>, transform_indices = @transform_1, window_bounds = array<i64: 256, 32>}, {pipeline_mode = #tpu.pipeline_mode<synchronous>, transform_indices = @transform_2, window_bounds = array<i64: 256, 1>}, {pipeline_mode = #tpu.pipeline_mode<synchronous>, transform_indices = @transform_3, window_bounds = array<i64: 128, 256>}, {pipeline_mode = #tpu.pipeline_mode<synchronous>, transform_indices = @transform_4, window_bounds = array<i64: 128, 1>}, {pipeline_mode = #tpu.pipeline_mode<synchronous>, transform_indices = @transform_5, window_bounds = array<i64: 128, 1>}, {pipeline_mode = #tpu.pipeline_mode<synchronous>, transform_indices = @transform_6, window_bounds = array<i64: 1, 1>}, {transform_indices = @transform_7, window_bounds = array<i64: 1, 256>}]} {
    %c0 = arith.constant 0 : index
    %c0_0 = arith.constant 0 : index
    %0 = vector.load %arg1[%c0, %c0_0] : memref<256x32xf32, #tpu.memory_space<vmem>>, vector<256x32xf32>
    %1 = tpu.transpose %0, [1, 0] : vector<256x32xf32> -> vector<32x256xf32>
    %2 = arith.truncf %1 : vector<32x256xf32> to vector<32x256xbf16>
    %c0_1 = arith.constant 0 : index
    %c0_2 = arith.constant 0 : index
    %3 = vector.load %arg2[%c0_1, %c0_2] : memref<256x32xbf16, #tpu.memory_space<vmem>>, vector<256x32xbf16>
    %cst = arith.constant dense<0.000000e+00> : vector<256x256xf32>
    %4 = tpu.matmul %3, %2, %cst {dimension_numbers = #tpu.dot_dimension_numbers<[1], [0], [0], [1], [0, 0, 1, 1], [], []>} : vector<256x32xbf16>, vector<32x256xbf16>, vector<256x256xf32> -> vector<256x256xf32>
    %5 = arith.truncf %4 : vector<256x256xf32> to vector<256x256xbf16>
    %c0_3 = arith.constant 0 : index
    %c0_4 = arith.constant 0 : index
    %6 = vector.load %arg3[%c0_3, %c0_4] : memref<256x1xbf16, #tpu.memory_space<vmem>>, vector<256x1xbf16>
    %7 = vector.broadcast %6 : vector<256x1xbf16> to vector<256x256xbf16>
    %8 = arith.addf %5, %7 : vector<256x256xbf16>
    %cst_5 = arith.constant 2.001950e-01 : bf16
    %9 = vector.broadcast %cst_5 : bf16 to vector<256x256xbf16>
    %10 = arith.mulf %9, %8 : vector<256x256xbf16>
    %11 = arith.maximumf %8, %10 : vector<256x256xbf16>
    %c0_6 = arith.constant 0 : index
    %c0_7 = arith.constant 0 : index
    %12 = vector.load %arg4[%c0_6, %c0_7] : memref<128x256xbf16, #tpu.memory_space<vmem>>, vector<128x256xbf16>
    %cst_8 = arith.constant dense<0.000000e+00> : vector<128x256xf32>
    %13 = tpu.matmul %12, %11, %cst_8 {dimension_numbers = #tpu.dot_dimension_numbers<[1], [0], [0], [1], [0, 0, 1, 1], [], []>} : vector<128x256xbf16>, vector<256x256xbf16>, vector<128x256xf32> -> vector<128x256xf32>
    %c0_9 = arith.constant 0 : index
    %c0_10 = arith.constant 0 : index
    %14 = vector.load %arg5[%c0_9, %c0_10] : memref<128x1xf32, #tpu.memory_space<vmem>>, vector<128x1xf32>
    %15 = vector.broadcast %14 : vector<128x1xf32> to vector<128x256xf32>
    %16 = arith.addf %13, %15 : vector<128x256xf32>
    %cst_11 = arith.constant 2.000000e-01 : f32
    %17 = vector.broadcast %cst_11 : f32 to vector<128x256xf32>
    %18 = arith.mulf %17, %16 : vector<128x256xf32>
    %19 = arith.maximumf %16, %18 : vector<128x256xf32>
    %c0_12 = arith.constant 0 : index
    %c0_13 = arith.constant 0 : index
    %20 = vector.load %arg6[%c0_12, %c0_13] : memref<128x1xf32, #tpu.memory_space<vmem>>, vector<128x1xf32>
    %21 = vector.broadcast %20 : vector<128x1xf32> to vector<128x256xf32>
    %22 = arith.mulf %19, %21 : vector<128x256xf32>
    %cst_14 = arith.constant dense<0.000000e+00> : vector<256xf32>
    %23 = vector.multi_reduction <add>, %22, %cst_14 [0] : vector<128x256xf32> to vector<256xf32>
    %24 = vector.shape_cast %23 : vector<256xf32> to vector<1x256xf32>
    %c0_15 = arith.constant 0 : index
    %c0_16 = arith.constant 0 : index
    %25 = vector.load %arg7[%c0_15, %c0_16] : memref<1x1xf32, #tpu.memory_space<vmem>>, vector<1x1xf32>
    %26 = vector.broadcast %25 : vector<1x1xf32> to vector<1x256xf32>
    %27 = arith.addf %24, %26 : vector<1x256xf32>
    %28 = arith.negf %27 : vector<1x256xf32>
    %29 = math.exp %28 : vector<1x256xf32>
    %cst_17 = arith.constant 1.000000e+00 : f32
    %30 = vector.broadcast %cst_17 : f32 to vector<1x256xf32>
    %31 = arith.addf %30, %29 : vector<1x256xf32>
    %32 = arith.divf %30, %31 : vector<1x256xf32>
    %c0_18 = arith.constant 0 : index
    %c0_19 = arith.constant 0 : index
    %33 = vector.load %arg8[%c0_18, %c0_19] : memref<1x256xf32, #tpu.memory_space<vmem>>, vector<1x256xf32>
    tpu.vector_store %arg8[%c0_18, %c0_19], %32 {strides = array<i32>} : memref<1x256xf32, #tpu.memory_space<vmem>>, vector<1x256xf32>,
    return
  }
  func.func @transform_0(%arg0: i32) -> (i32, i32) {
    %c0_i32 = arith.constant 0 : i32
    %c0_i32_0 = arith.constant 0 : i32
    return %arg0, %c0_i32 : i32, i32
  }
  func.func @transform_1(%arg0: i32) -> (i32, i32) {
    %c0_i32 = arith.constant 0 : i32
    %c0_i32_0 = arith.constant 0 : i32
    %c0_i32_1 = arith.constant 0 : i32
    return %c0_i32, %c0_i32_0 : i32, i32
  }
  func.func @transform_2(%arg0: i32) -> (i32, i32) {
    %c0_i32 = arith.constant 0 : i32
    %c0_i32_0 = arith.constant 0 : i32
    %c0_i32_1 = arith.constant 0 : i32
    return %c0_i32, %c0_i32_0 : i32, i32
  }
  func.func @transform_3(%arg0: i32) -> (i32, i32) {
    %c0_i32 = arith.constant 0 : i32
    %c0_i32_0 = arith.constant 0 : i32
    %c0_i32_1 = arith.constant 0 : i32
    return %c0_i32, %c0_i32_0 : i32, i32
  }
  func.func @transform_4(%arg0: i32) -> (i32, i32) {
    %c0_i32 = arith.constant 0 : i32
    %c0_i32_0 = arith.constant 0 : i32
    %c0_i32_1 = arith.constant 0 : i32
    return %c0_i32, %c0_i32_0 : i32, i32
  }
  func.func @transform_5(%arg0: i32) -> (i32, i32) {
    %c0_i32 = arith.constant 0 : i32
    %c0_i32_0 = arith.constant 0 : i32
    %c0_i32_1 = arith.constant 0 : i32
    return %c0_i32, %c0_i32_0 : i32, i32
  }
  func.func @transform_6(%arg0: i32) -> (i32, i32) {
    %c0_i32 = arith.constant 0 : i32
    %c0_i32_0 = arith.constant 0 : i32
    %c0_i32_1 = arith.constant 0 : i32
    return %c0_i32, %c0_i32_0 : i32, i32
  }
  func.func @transform_7(%arg0: i32) -> (i32, i32) {
    %c0_i32 = arith.constant 0 : i32
    %c0_i32_0 = arith.constant 0 : i32
    return %c0_i32, %arg0 : i32, i32
  }
}

</mosaic_0001>

<llo_original>
// kernel: discriminator_forward.1
$region0: #{discriminator_forward.1}
  #allocation0 [shape = 'u32[]', space=smem, size = 0x4, offset = 0x4, fixed_abs, tag = 'smem constant byte address 0x4 - core index']
  #allocation1 [shape = 'u32[72,128]{1,0:T(1,128)}', space=vmem, size = 0x9000, scoped, tag = 'internal scratch']
  #allocation2 [shape = 'f32[1,1]{1,0:T(1,128)S(1)}', space=vmem, size = 0x200, scoped, tag = 'scoped memory for discriminator_forward.1']
  %s0 = inlined_call_operand.vmem [shape: f32[512,32], index: 0, kind: input, shape index: {}]
  %s1 = inlined_call_operand.vmem [shape: bf16[256,32], index: 1, kind: input, shape index: {}]
  %s2 = inlined_call_operand.vmem [shape: bf16[256,1], index: 2, kind: input, shape index: {}]
  %s3 = inlined_call_operand.vmem [shape: bf16[128,256], index: 3, kind: input, shape index: {}]
  %s4 = inlined_call_operand.vmem [shape: f32[128,1], index: 4, kind: input, shape index: {}]
  %s5 = inlined_call_operand.vmem [shape: f32[128,1], index: 5, kind: input, shape index: {}]
  %s6 = inlined_call_operand.<no memory space> [shape: f32[1,1], index: 6, kind: input, shape index: {}]
  %s7 = inlined_call_operand.hbm [shape: f32[1,512], index: 7, kind: output, shape index: {}]
  %s8 = sld [smem:[#allocation0]]
  $region61: #{discriminator_forward.1} parent=0
    _
  %s10 = ssub.s32 1, %s8
  %s11 = scalar_select 0, %s10, %s8
  %v12 = vstv %s6
  %13 = vst [vmem:[#allocation2] sm:$0x1] %v12
  $region1: #{discriminator_forward.1} parent=0
    #allocation3 [shape = 'u8[2048]{0}', space=vmem, size = 0x800, scoped, tag = 'output window, operand 0']
    #allocation4 [shape = 's32[2]{0}', space=sflag, size = 0x8, scoped, tag = 'scoped memory for discriminator_forward.1']
    %14 = vsyncpa [#allocation4], 0
    %s15 = scalar_lea.sflag [#allocation4], 1
    %16 = vsyncpa %s15, 0
    loop: start=0, step=1, limit=4
    $region2: #{discriminator_forward.1} parent=1 // loop_pre_header
      _
    $region3: #{discriminator_forward.1} parent=1 // loop_header
      %s18 = sphi 0, %s22
      %p19 = scmp.ge.s32.totalorder %s18, 4
      %s28 = sphi 0, %s30
      %s31 = sphi 0, %s28
      %s32 = sphi 0, %s31
      %s48 = sphi 0, %s32
      %s52 = sphi 0, %s52
      %s54 = sphi 0, %s52
      %s55 = sphi 0, %s54
      %s69 = sphi 0, %s55
      %s73 = sphi 0, %s73
      %s75 = sphi 0, %s73
      %s76 = sphi 0, %s75
      %s90 = sphi 0, %s76
      %s94 = sphi 0, %s94
      %s96 = sphi 0, %s94
      %s97 = sphi 0, %s96
      %s111 = sphi 0, %s97
      %s115 = sphi 0, %s115
      %s117 = sphi 0, %s115
      %s118 = sphi 0, %s117
      %s132 = sphi 0, %s118
      %s136 = sphi 0, %s136
      %s138 = sphi 0, %s136
      %s139 = sphi 0, %s138
      %s153 = sphi 0, %s139
      %s157 = sphi 0, %s157
      %s159 = sphi 0, %s157
      %s160 = sphi 0, %s159
      %s174 = sphi 0, %s160
      %s180 = sphi 0, %s182
      %s183 = sphi 0, %s180
      %s184 = sphi 0, %s183
      %s200 = sphi 0, %s184
    $region4: #{discriminator_forward.1} parent=1 // loop_header_branch
      %21 = sbr.rel (%p19) target = $region8
    $region5: #{discriminator_forward.1} parent=1 // loop_body
      %s23 = ssub.s32 %s18, 1
      %s24 = ssub.s32 %s18, 2
      %s25 = sadd.s32 %s18, 1
      %s26 = ssub.s32 %s18, %s25
      %p27 = scmp.eq.s32.totalorder %s26, 0
      %s29 = sadd.s32 %s28, 1
      %s30 = scalar_select %p27, %s28, %s29
      %p33 = pneg %p27
      %p34 = scmp.eq.s32.totalorder %s18, 1
      %p35 = por %p33, %p34
      %p36 = scmp.ne.s32.totalorder %s28, %s31
      %p37 = scmp.eq.s32.totalorder %s18, 0
      %p38 = por %p36, %p37
      %p39 = scmp.ne.s32.totalorder %s28, %s31
      %p40 = scmp.eq.s32.totalorder %s23, 1
      %p41 = por %p39, %p40
      %p42 = scmp.ne.s32.totalorder %s31, %s32
      %p43 = scmp.eq.s32.totalorder %s23, 0
      %p44 = por %p42, %p43
      %p45 = scmp.ne.s32.totalorder %s31, %s32
      %p46 = scmp.eq.s32.totalorder %s24, 1
      %p47 = por %p45, %p46
      %p49 = scmp.ne.s32.totalorder %s32, %s48
      %p50 = scmp.eq.s32.totalorder %s24, 0
      %p51 = por %p49, %p50
      %s53 = sadd.s32 %s52, 1
      %p56 = scmp.eq.s32.totalorder %s18, 1
      %p57 = scmp.ne.s32.totalorder %s52, %s54
      %p58 = scmp.eq.s32.totalorder %s18, 0
      %p59 = por %p57, %p58
      %p60 = scmp.ne.s32.totalorder %s52, %s54
      %p61 = scmp.eq.s32.totalorder %s23, 1
      %p62 = por %p60, %p61
      %p63 = scmp.ne.s32.totalorder %s54, %s55
      %p64 = scmp.eq.s32.totalorder %s23, 0
      %p65 = por %p63, %p64
      %p66 = scmp.ne.s32.totalorder %s54, %s55
      %p67 = scmp.eq.s32.totalorder %s24, 1
      %p68 = por %p66, %p67
      %p70 = scmp.ne.s32.totalorder %s55, %s69
      %p71 = scmp.eq.s32.totalorder %s24, 0
      %p72 = por %p70, %p71
      %s74 = sadd.s32 %s73, 1
      %p77 = scmp.eq.s32.totalorder %s18, 1
      %p78 = scmp.ne.s32.totalorder %s73, %s75
      %p79 = scmp.eq.s32.totalorder %s18, 0
      %p80 = por %p78, %p79
      %p81 = scmp.ne.s32.totalorder %s73, %s75
      %p82 = scmp.eq.s32.totalorder %s23, 1
      %p83 = por %p81, %p82
      %p84 = scmp.ne.s32.totalorder %s75, %s76
      %p85 = scmp.eq.s32.totalorder %s23, 0
      %p86 = por %p84, %p85
      %p87 = scmp.ne.s32.totalorder %s75, %s76
      %p88 = scmp.eq.s32.totalorder %s24, 1
      %p89 = por %p87, %p88
      %p91 = scmp.ne.s32.totalorder %s76, %s90
      %p92 = scmp.eq.s32.totalorder %s24, 0
      %p93 = por %p91, %p92
      %s95 = sadd.s32 %s94, 1
      %p98 = scmp.eq.s32.totalorder %s18, 1
      %p99 = scmp.ne.s32.totalorder %s94, %s96
      %p100 = scmp.eq.s32.totalorder %s18, 0
      %p101 = por %p99, %p100
      %p102 = scmp.ne.s32.totalorder %s94, %s96
      %p103 = scmp.eq.s32.totalorder %s23, 1
      %p104 = por %p102, %p103
      %p105 = scmp.ne.s32.totalorder %s96, %s97
      %p106 = scmp.eq.s32.totalorder %s23, 0
      %p107 = por %p105, %p106
      %p108 = scmp.ne.s32.totalorder %s96, %s97
      %p109 = scmp.eq.s32.totalorder %s24, 1
      %p110 = por %p108, %p109
      %p112 = scmp.ne.s32.totalorder %s97, %s111
      %p113 = scmp.eq.s32.totalorder %s24, 0
      %p114 = por %p112, %p113
      %s116 = sadd.s32 %s115, 1
      %p119 = scmp.eq.s32.totalorder %s18, 1
      %p120 = scmp.ne.s32.totalorder %s115, %s117
      %p121 = scmp.eq.s32.totalorder %s18, 0
      %p122 = por %p120, %p121
      %p123 = scmp.ne.s32.totalorder %s115, %s117
      %p124 = scmp.eq.s32.totalorder %s23, 1
      %p125 = por %p123, %p124
      %p126 = scmp.ne.s32.totalorder %s117, %s118
      %p127 = scmp.eq.s32.totalorder %s23, 0
      %p128 = por %p126, %p127
      %p129 = scmp.ne.s32.totalorder %s117, %s118
      %p130 = scmp.eq.s32.totalorder %s24, 1
      %p131 = por %p129, %p130
      %p133 = scmp.ne.s32.totalorder %s118, %s132
      %p134 = scmp.eq.s32.totalorder %s24, 0
      %p135 = por %p133, %p134
      %s137 = sadd.s32 %s136, 1
      %p140 = scmp.eq.s32.totalorder %s18, 1
      %p141 = scmp.ne.s32.totalorder %s136, %s138
      %p142 = scmp.eq.s32.totalorder %s18, 0
      %p143 = por %p141, %p142
      %p144 = scmp.ne.s32.totalorder %s136, %s138
      %p145 = scmp.eq.s32.totalorder %s23, 1
      %p146 = por %p144, %p145
      %p147 = scmp.ne.s32.totalorder %s138, %s139
      %p148 = scmp.eq.s32.totalorder %s23, 0
      %p149 = por %p147, %p148
      %p150 = scmp.ne.s32.totalorder %s138, %s139
      %p151 = scmp.eq.s32.totalorder %s24, 1
      %p152 = por %p150, %p151
      %p154 = scmp.ne.s32.totalorder %s139, %s153
      %p155 = scmp.eq.s32.totalorder %s24, 0
      %p156 = por %p154, %p155
      %s158 = sadd.s32 %s157, 1
      %p161 = scmp.eq.s32.totalorder %s18, 1
      %p162 = scmp.ne.s32.totalorder %s157, %s159
      %p163 = scmp.eq.s32.totalorder %s18, 0
      %p164 = por %p162, %p163
      %p165 = scmp.ne.s32.totalorder %s157, %s159
      %p166 = scmp.eq.s32.totalorder %s23, 1
      %p167 = por %p165, %p166
      %p168 = scmp.ne.s32.totalorder %s159, %s160
      %p169 = scmp.eq.s32.totalorder %s23, 0
      %p170 = por %p168, %p169
      %p171 = scmp.ne.s32.totalorder %s159, %s160
      %p172 = scmp.eq.s32.totalorder %s24, 1
      %p173 = por %p171, %p172
      %p175 = scmp.ne.s32.totalorder %s160, %s174
      %p176 = scmp.eq.s32.totalorder %s24, 0
      %p177 = por %p175, %p176
      %s178 = ssub.s32 %s18, %s25
      %p179 = scmp.eq.s32.totalorder %s178, 0
      %s181 = sadd.s32 %s180, 1
      %s182 = scalar_select %p179, %s180, %s181
      %p185 = pneg %p179
      %p186 = scmp.eq.s32.totalorder %s18, 1
      %p187 = por %p185, %p186
      %p188 = scmp.ne.s32.totalorder %s180, %s183
      %p189 = scmp.eq.s32.totalorder %s18, 0
      %p190 = por %p188, %p189
      %p191 = scmp.ne.s32.totalorder %s180, %s183
      %p192 = scmp.eq.s32.totalorder %s23, 1
      %p193 = por %p191, %p192
      %p194 = scmp.ne.s32.totalorder %s183, %s184
      %p195 = scmp.eq.s32.totalorder %s23, 0
      %p196 = por %p194, %p195
      %p197 = scmp.ne.s32.totalorder %s183, %s184
      %p198 = scmp.eq.s32.totalorder %s24, 1
      %p199 = por %p197, %p198
      %p201 = scmp.ne.s32.totalorder %s184, %s200
      %p202 = scmp.eq.s32.totalorder %s24, 0
      %p203 = por %p201, %p202
      %p204 = scmp.le.s32.totalorder 1, %s18
      %p205 = scmp.lt.s32.totalorder %s18, 3
      %p206 = pnand %p204, %p205
      %p207 = pneg %p206
      // Predicated region
      $region9: #{discriminator_forward.1} parent=5 // pred_check
        _
      $region10: #{discriminator_forward.1} parent=5 // pred_check_branch
        %209 = sbr.rel (%p206) target = $region12
      $region11: #{discriminator_forward.1} parent=5 // pred_region
        %s210 = ssub.s32 %s18, 1
        // Predicated region
        $region13: #{discriminator_forward.1} parent=11 // pred_check
          %p211 = pneg %p65
        $region14: #{discriminator_forward.1} parent=11 // pred_check_branch
          %213 = sbr.rel (%p211) target = $region16
        $region15: #{discriminator_forward.1} parent=11 // pred_region
          _
        $region16: #{discriminator_forward.1} parent=11 // pred_fallthru
          _
        // Predicated region
        $region17: #{discriminator_forward.1} parent=11 // pred_check
          %p214 = pneg %p86
        $region18: #{discriminator_forward.1} parent=11 // pred_check_branch
          %216 = sbr.rel (%p214) target = $region20
        $region19: #{discriminator_forward.1} parent=11 // pred_region
          _
        $region20: #{discriminator_forward.1} parent=11 // pred_fallthru
          _
        // Predicated region
        $region21: #{discriminator_forward.1} parent=11 // pred_check
          %p217 = pneg %p107
        $region22: #{discriminator_forward.1} parent=11 // pred_check_branch
          %219 = sbr.rel (%p217) target = $region24
        $region23: #{discriminator_forward.1} parent=11 // pred_region
          _
        $region24: #{discriminator_forward.1} parent=11 // pred_fallthru
          _
        // Predicated region
        $region25: #{discriminator_forward.1} parent=11 // pred_check
          %p220 = pneg %p128
        $region26: #{discriminator_forward.1} parent=11 // pred_check_branch
          %222 = sbr.rel (%p220) target = $region28
        $region27: #{discriminator_forward.1} parent=11 // pred_region
          _
        $region28: #{discriminator_forward.1} parent=11 // pred_fallthru
          _
        // Predicated region
        $region29: #{discriminator_forward.1} parent=11 // pred_check
          %p223 = pneg %p149
        $region30: #{discriminator_forward.1} parent=11 // pred_check_branch
          %225 = sbr.rel (%p223) target = $region32
        $region31: #{discriminator_forward.1} parent=11 // pred_region
          _
        $region32: #{discriminator_forward.1} parent=11 // pred_fallthru
          _
        // Predicated region
        $region33: #{discriminator_forward.1} parent=11 // pred_check
          %p226 = pneg %p170
        $region34: #{discriminator_forward.1} parent=11 // pred_check_branch
          %228 = sbr.rel (%p226) target = $region36
        $region35: #{discriminator_forward.1} parent=11 // pred_region
          _
        $region36: #{discriminator_forward.1} parent=11 // pred_fallthru
          _
      $region12: #{discriminator_forward.1} parent=5 // pred_fallthru
        _
      %p229 = scmp.lt.s32.totalorder %s18, 2
      // Predicated region
      $region37: #{discriminator_forward.1} parent=5 // pred_check
        %p230 = pneg %p229
      $region38: #{discriminator_forward.1} parent=5 // pred_check_branch
        %232 = sbr.rel (%p230) target = $region40
      $region39: #{discriminator_forward.1} parent=5 // pred_region
        // Predicated region
        $region41: #{discriminator_forward.1} parent=39 // pred_check
          %p233 = pneg %p38
        $region42: #{discriminator_forward.1} parent=39 // pred_check_branch
          %235 = sbr.rel (%p233) target = $region44
        $region43: #{discriminator_forward.1} parent=39 // pred_region
          %s236 = smul.u32 32, %s18
          %p237 = scmp.lt.s32.totalorder %s236, 63
          %s238 = scalar_select %p237, %s236, 63
          %s239 = smul.addr %s238, 8
          %s240 = scalar_lea.vmem %s0, %s239
          %s241 = smul.u32 32, %s18
        $region44: #{discriminator_forward.1} parent=39 // pred_fallthru
          _
      $region40: #{discriminator_forward.1} parent=5 // pred_fallthru
        _
      %p242 = scmp.le.s32.totalorder 1, %s18
      %p243 = scmp.lt.s32.totalorder %s18, 3
      %p244 = pnand %p242, %p243
      %p245 = pneg %p244
      // Predicated region
      $region45: #{discriminator_forward.1} parent=5 // pred_check
        _
      $region46: #{discriminator_forward.1} parent=5 // pred_check_branch
        %247 = sbr.rel (%p244) target = $region48
      $region47: #{discriminator_forward.1} parent=5 // pred_region
        %s248 = ssub.s32 %s18, 1
        %s249 = smul.u32 32, %s23
        %p250 = scmp.lt.s32.totalorder %s249, 63
        %s251 = scalar_select %p250, %s249, 63
        %s252 = smul.addr %s251, 8
        %s253 = scalar_lea.vmem %s0, %s252
        %p254 = pneg %p44
        %p255 = pneg %p41
        %p256 = pneg %p65
        %p257 = pneg %p62
        %p258 = pneg %p86
        %p259 = pneg %p83
        %p260 = pneg %p107
        %p261 = pneg %p104
        %p262 = pneg %p128
        %p263 = pneg %p125
        %p264 = pneg %p149
        %p265 = pneg %p146
        %p266 = pneg %p170
        %p267 = pneg %p167
        %p268 = pneg %p196
        %p269 = pneg %p193
        %s270 = sand.u32 %s183, 1
        %s271 = scalar_lea.sflag [#allocation4], %s270
        %s272 = sand.u32 %s183, 1
        %s273 = smul.addr %s272, 2
        %s274 = scalar_lea.vmem [#allocation3], %s273
        %s275 = smul.u32 32, %s23
        %p276 = scmp.lt.s32.totalorder %s275, 63
        %s277 = scalar_select %p276, %s275, 63
        %s278 = smul.addr %s277, 8
        %s279 = scalar_lea.vmem %s0, %s278
        %s280 = smul.u32 32, %s23
        %s281 = smul.u32 2, %s23
        %v283 = vld [vmem:[%s279] sm:$0xff]
        %v284 = vld [vmem:[%s279 + $0x8] sm:$0xff]
        %v285 = vld [vmem:[%s279 + $0x10] sm:$0xff]
        %v286 = vld [vmem:[%s279 + $0x18] sm:$0xff]
        %v287 = vld [vmem:[%s279 + $0x20] sm:$0xff]
        %v288 = vld [vmem:[%s279 + $0x28] sm:$0xff]
        %v289 = vld [vmem:[%s279 + $0x30] sm:$0xff]
        %v290 = vld [vmem:[%s279 + $0x38] sm:$0xff]
        %v291 = vld [vmem:[%s279 + $0x40] sm:$0xff]
        %v292 = vld [vmem:[%s279 + $0x48] sm:$0xff]
        %v293 = vld [vmem:[%s279 + $0x50] sm:$0xff]
        %v294 = vld [vmem:[%s279 + $0x58] sm:$0xff]
        %v295 = vld [vmem:[%s279 + $0x60] sm:$0xff]
        %v296 = vld [vmem:[%s279 + $0x68] sm:$0xff]
        %v297 = vld [vmem:[%s279 + $0x70] sm:$0xff]
        %v298 = vld [vmem:[%s279 + $0x78] sm:$0xff]
        %v299 = vld [vmem:[%s279 + $0x80] sm:$0xff]
        %v300 = vld [vmem:[%s279 + $0x88] sm:$0xff]
        %v301 = vld [vmem:[%s279 + $0x90] sm:$0xff]
        %v302 = vld [vmem:[%s279 + $0x98] sm:$0xff]
        %v303 = vld [vmem:[%s279 + $0xa0] sm:$0xff]
        %v304 = vld [vmem:[%s279 + $0xa8] sm:$0xff]
        %v305 = vld [vmem:[%s279 + $0xb0] sm:$0xff]
        %v306 = vld [vmem:[%s279 + $0xb8] sm:$0xff]
        %v307 = vld [vmem:[%s279 + $0xc0] sm:$0xff]
        %v308 = vld [vmem:[%s279 + $0xc8] sm:$0xff]
        %v309 = vld [vmem:[%s279 + $0xd0] sm:$0xff]
        %v310 = vld [vmem:[%s279 + $0xd8] sm:$0xff]
        %v311 = vld [vmem:[%s279 + $0xe0] sm:$0xff]
        %v312 = vld [vmem:[%s279 + $0xe8] sm:$0xff]
        %v313 = vld [vmem:[%s279 + $0xf0] sm:$0xff]
        %v314 = vld [vmem:[%s279 + $0xf8] sm:$0xff]
        %315 = vxpose.xlu0.b32.start [1/16] %v283, 128
        %316 = vxpose.xlu0.b32.cont [2/16] %v284, 128
        %317 = vxpose.xlu0.b32.cont [3/16] %v285, 128
        %318 = vxpose.xlu0.b32.cont [4/16] %v286, 128
        %319 = vxpose.xlu0.b32.cont [5/16] %v287, 128
        %320 = vxpose.xlu0.b32.cont [6/16] %v288, 128
        %321 = vxpose.xlu0.b32.cont [7/16] %v289, 128
        %322 = vxpose.xlu0.b32.cont [8/16] %v290, 128
        %323 = vxpose.xlu0.b32.cont [9/16] %v291, 128
        %324 = vxpose.xlu0.b32.cont [10/16] %v292, 128
        %325 = vxpose.xlu0.b32.cont [11/16] %v293, 128
        %326 = vxpose.xlu0.b32.cont [12/16] %v294, 128
        %327 = vxpose.xlu0.b32.cont [13/16] %v295, 128
        %328 = vxpose.xlu0.b32.cont [14/16] %v296, 128
        %329 = vxpose.xlu0.b32.cont [15/16] %v297, 128
        %330 = vxpose.xlu0.b32.end [16/16] %v298, 128
        %v331 = vpop.trf.xlu0
        %v332 = vpop.trf.xlu0
        %v333 = vpop.trf.xlu0
        %v334 = vpop.trf.xlu0
        %v335 = vpop.trf.xlu0
        %v336 = vpop.trf.xlu0
        %v337 = vpop.trf.xlu0
        %v338 = vpop.trf.xlu0
        %v339 = vpop.trf.xlu0
        %v340 = vpop.trf.xlu0
        %v341 = vpop.trf.xlu0
        %v342 = vpop.trf.xlu0
        %v343 = vpop.trf.xlu0
        %v344 = vpop.trf.xlu0
        %v345 = vpop.trf.xlu0
        %v346 = vpop.trf.xlu0
        %347 = vxpose.xlu0.b32.start [1/16] %v299, 128
        %348 = vxpose.xlu0.b32.cont [2/16] %v300, 128
        %349 = vxpose.xlu0.b32.cont [3/16] %v301, 128
        %350 = vxpose.xlu0.b32.cont [4/16] %v302, 128
        %351 = vxpose.xlu0.b32.cont [5/16] %v303, 128
        %352 = vxpose.xlu0.b32.cont [6/16] %v304, 128
        %353 = vxpose.xlu0.b32.cont [7/16] %v305, 128
        %354 = vxpose.xlu0.b32.cont [8/16] %v306, 128
        %355 = vxpose.xlu0.b32.cont [9/16] %v307, 128
        %356 = vxpose.xlu0.b32.cont [10/16] %v308, 128
        %357 = vxpose.xlu0.b32.cont [11/16] %v309, 128
        %358 = vxpose.xlu0.b32.cont [12/16] %v310, 128
        %359 = vxpose.xlu0.b32.cont [13/16] %v311, 128
        %360 = vxpose.xlu0.b32.cont [14/16] %v312, 128
        %361 = vxpose.xlu0.b32.cont [15/16] %v313, 128
        %362 = vxpose.xlu0.b32.end [16/16] %v314, 128
        %v363 = vpop.trf.xlu0
        %v364 = vpop.trf.xlu0
        %v365 = vpop.trf.xlu0
        %v366 = vpop.trf.xlu0
        %v367 = vpop.trf.xlu0
        %v368 = vpop.trf.xlu0
        %v369 = vpop.trf.xlu0
        %v370 = vpop.trf.xlu0
        %v371 = vpop.trf.xlu0
        %v372 = vpop.trf.xlu0
        %v373 = vpop.trf.xlu0
        %v374 = vpop.trf.xlu0
        %v375 = vpop.trf.xlu0
        %v376 = vpop.trf.xlu0
        %v377 = vpop.trf.xlu0
        %v378 = vpop.trf.xlu0
        %v379 = vpack.c.bf16 %v332, %v331
        %v380 = vpack.c.bf16 %v364, %v363
        %v381 = vpack.c.bf16 %v334, %v333
        %v382 = vpack.c.bf16 %v366, %v365
        %v383 = vld [vmem:[%s1] sm:$0xf]
        %v384 = vld [vmem:[%s1 + $0x4] sm:$0xf]
        %v385 = vld [vmem:[%s1 + $0x8] sm:$0xf]
        %v386 = vld [vmem:[%s1 + $0xc] sm:$0xf]
        %v387 = vld [vmem:[%s1 + $0x10] sm:$0xf]
        %v388 = vld [vmem:[%s1 + $0x14] sm:$0xf]
        %v389 = vld [vmem:[%s1 + $0x18] sm:$0xf]
        %v390 = vld [vmem:[%s1 + $0x1c] sm:$0xf]
        %v391 = vld [vmem:[%s1 + $0x20] sm:$0xf]
        %v392 = vld [vmem:[%s1 + $0x24] sm:$0xf]
        %v393 = vld [vmem:[%s1 + $0x28] sm:$0xf]
        %v394 = vld [vmem:[%s1 + $0x2c] sm:$0xf]
        %v395 = vld [vmem:[%s1 + $0x30] sm:$0xf]
        %v396 = vld [vmem:[%s1 + $0x34] sm:$0xf]
        %v397 = vld [vmem:[%s1 + $0x38] sm:$0xf]
        %v398 = vld [vmem:[%s1 + $0x3c] sm:$0xf]
        %v399 = vld [vmem:[%s1 + $0x40] sm:$0xf]
        %v400 = vld [vmem:[%s1 + $0x44] sm:$0xf]
        %v401 = vld [vmem:[%s1 + $0x48] sm:$0xf]
        %v402 = vld [vmem:[%s1 + $0x4c] sm:$0xf]
        %v403 = vld [vmem:[%s1 + $0x50] sm:$0xf]
        %v404 = vld [vmem:[%s1 + $0x54] sm:$0xf]
        %v405 = vld [vmem:[%s1 + $0x58] sm:$0xf]
        %v406 = vld [vmem:[%s1 + $0x5c] sm:$0xf]
        %v407 = vld [vmem:[%s1 + $0x60] sm:$0xf]
        %v408 = vld [vmem:[%s1 + $0x64] sm:$0xf]
        %v409 = vld [vmem:[%s1 + $0x68] sm:$0xf]
        %v410 = vld [vmem:[%s1 + $0x6c] sm:$0xf]
        %v411 = vld [vmem:[%s1 + $0x70] sm:$0xf]
        %v412 = vld [vmem:[%s1 + $0x74] sm:$0xf]
        %v413 = vld [vmem:[%s1 + $0x78] sm:$0xf]
        %v414 = vld [vmem:[%s1 + $0x7c] sm:$0xf]
        %v447 = vunpack.c.l.b16 %v383
        %v448 = vunpack.c.l.b16 %v384
        %v449 = vunpack.c.l.b16 %v385
        %v450 = vunpack.c.l.b16 %v386
        %v451 = vunpack.c.l.b16 %v387
        %v452 = vunpack.c.l.b16 %v388
        %v453 = vunpack.c.l.b16 %v389
        %v454 = vunpack.c.l.b16 %v390
        %v455 = vunpack.c.l.b16 %v391
        %v456 = vunpack.c.l.b16 %v392
        %v457 = vunpack.c.l.b16 %v393
        %v458 = vunpack.c.l.b16 %v394
        %v459 = vunpack.c.l.b16 %v395
        %v460 = vunpack.c.l.b16 %v396
        %v461 = vunpack.c.l.b16 %v397
        %v462 = vunpack.c.l.b16 %v398
        %v463 = vunpack.c.l.b16 %v399
        %v464 = vunpack.c.l.b16 %v400
        %v465 = vunpack.c.l.b16 %v401
        %v466 = vunpack.c.l.b16 %v402
        %v467 = vunpack.c.l.b16 %v403
        %v468 = vunpack.c.l.b16 %v404
        %v469 = vunpack.c.l.b16 %v405
        %v470 = vunpack.c.l.b16 %v406
        %v471 = vunpack.c.l.b16 %v407
        %v472 = vunpack.c.l.b16 %v408
        %v473 = vunpack.c.l.b16 %v409
        %v474 = vunpack.c.l.b16 %v410
        %v475 = vunpack.c.l.b16 %v411
        %v476 = vunpack.c.l.b16 %v412
        %v477 = vunpack.c.l.b16 %v413
        %v478 = vunpack.c.l.b16 %v414
        %v479 = vpack.c.b16 %v448, %v447
        %v480 = vpack.c.b16 %v450, %v449
        %v481 = vpack.c.b16 %v452, %v451
        %v482 = vpack.c.b16 %v454, %v453
        %v483 = vpack.c.b16 %v456, %v455
        %v484 = vpack.c.b16 %v458, %v457
        %v485 = vpack.c.b16 %v460, %v459
        %v486 = vpack.c.b16 %v462, %v461
        %v487 = vpack.c.b16 %v464, %v463
        %v488 = vpack.c.b16 %v466, %v465
        %v489 = vpack.c.b16 %v468, %v467
        %v490 = vpack.c.b16 %v470, %v469
        %v491 = vpack.c.b16 %v472, %v471
        %v492 = vpack.c.b16 %v474, %v473
        %v493 = vpack.c.b16 %v476, %v475
        %v494 = vpack.c.b16 %v478, %v477
        %vm495 = vcmask 261120
        %v497 = vsel %vm495, %v479, 0
        %v500 = vsel %vm495, %v480, 0
        %v503 = vsel %vm495, %v481, 0
        %v506 = vsel %vm495, %v482, 0
        %v509 = vsel %vm495, %v483, 0
        %v512 = vsel %vm495, %v484, 0
        %v515 = vsel %vm495, %v485, 0
        %v518 = vsel %vm495, %v486, 0
        %v521 = vsel %vm495, %v487, 0
        %v524 = vsel %vm495, %v488, 0
        %v527 = vsel %vm495, %v489, 0
        %v530 = vsel %vm495, %v490, 0
        %v533 = vsel %vm495, %v491, 0
        %v536 = vsel %vm495, %v492, 0
        %v539 = vsel %vm495, %v493, 0
        %v542 = vsel %vm495, %v494, 0
        %544 = vmatpush.bf16.msra.mxu0 0
        %545 = vmatpush.bf16.msra.mxu0 0
        %546 = vmatpush.bf16.msra.mxu0 0
        %547 = vmatpush.bf16.msra.mxu0 0
        %548 = vmatpush.bf16.msra.mxu0 0
        %549 = vmatpush.bf16.msra.mxu0 0
        %550 = vmatpush.bf16.msra.mxu0 %v381
        %551 = vmatpush.bf16.msra.mxu0 %v379
        %552 = vmatmul.bf16.gmra.mxu0 %v497
        %v553 = vpop.f32.mrf.mxu0
        %v554 = vadd.f32 0.0, %v553
        %v555 = vpop.f32.mrf.mxu0
        %v556 = vadd.f32 0.0, %v555
        %557 = vmatmul.bf16.gmra.mxu0 %v500
        %v558 = vpop.f32.mrf.mxu0
        %v559 = vadd.f32 0.0, %v558
        %v560 = vpop.f32.mrf.mxu0
        %v561 = vadd.f32 0.0, %v560
        %562 = vmatmul.bf16.gmra.mxu0 %v503
        %v563 = vpop.f32.mrf.mxu0
        %v564 = vadd.f32 0.0, %v563
        %v565 = vpop.f32.mrf.mxu0
        %v566 = vadd.f32 0.0, %v565
        %567 = vmatmul.bf16.gmra.mxu0 %v506
        %v568 = vpop.f32.mrf.mxu0
        %v569 = vadd.f32 0.0, %v568
        %v570 = vpop.f32.mrf.mxu0
        %v571 = vadd.f32 0.0, %v570
        %572 = vmatmul.bf16.gmra.mxu0 %v509
        %v573 = vpop.f32.mrf.mxu0
        %v574 = vadd.f32 0.0, %v573
        %v575 = vpop.f32.mrf.mxu0
        %v576 = vadd.f32 0.0, %v575
        %577 = vmatmul.bf16.gmra.mxu0 %v512
        %v578 = vpop.f32.mrf.mxu0
        %v579 = vadd.f32 0.0, %v578
        %v580 = vpop.f32.mrf.mxu0
        %v581 = vadd.f32 0.0, %v580
        %582 = vmatmul.bf16.gmra.mxu0 %v515
        %v583 = vpop.f32.mrf.mxu0
        %v584 = vadd.f32 0.0, %v583
        %v585 = vpop.f32.mrf.mxu0
        %v586 = vadd.f32 0.0, %v585
        %587 = vmatmul.bf16.gmra.mxu0 %v518
        %v588 = vpop.f32.mrf.mxu0
        %v589 = vadd.f32 0.0, %v588
        %v590 = vpop.f32.mrf.mxu0
        %v591 = vadd.f32 0.0, %v590
        %592 = vmatmul.bf16.gmra.mxu0 %v521
        %v593 = vpop.f32.mrf.mxu0
        %v594 = vadd.f32 0.0, %v593
        %v595 = vpop.f32.mrf.mxu0
        %v596 = vadd.f32 0.0, %v595
        %597 = vmatmul.bf16.gmra.mxu0 %v524
        %v598 = vpop.f32.mrf.mxu0
        %v599 = vadd.f32 0.0, %v598
        %v600 = vpop.f32.mrf.mxu0
        %v601 = vadd.f32 0.0, %v600
        %602 = vmatmul.bf16.gmra.mxu0 %v527
        %v603 = vpop.f32.mrf.mxu0
        %v604 = vadd.f32 0.0, %v603
        %v605 = vpop.f32.mrf.mxu0
        %v606 = vadd.f32 0.0, %v605
        %607 = vmatmul.bf16.gmra.mxu0 %v530
        %v608 = vpop.f32.mrf.mxu0
        %v609 = vadd.f32 0.0, %v608
        %v610 = vpop.f32.mrf.mxu0
        %v611 = vadd.f32 0.0, %v610
        %612 = vmatmul.bf16.gmra.mxu0 %v533
        %v613 = vpop.f32.mrf.mxu0
        %v614 = vadd.f32 0.0, %v613
        %v615 = vpop.f32.mrf.mxu0
        %v616 = vadd.f32 0.0, %v615
        %617 = vmatmul.bf16.gmra.mxu0 %v536
        %v618 = vpop.f32.mrf.mxu0
        %v619 = vadd.f32 0.0, %v618
        %v620 = vpop.f32.mrf.mxu0
        %v621 = vadd.f32 0.0, %v620
        %622 = vmatmul.bf16.gmra.mxu0 %v539
        %v623 = vpop.f32.mrf.mxu0
        %v624 = vadd.f32 0.0, %v623
        %v625 = vpop.f32.mrf.mxu0
        %v626 = vadd.f32 0.0, %v625
        %627 = vmatmul.bf16.gmra.mxu0 %v542
        %v628 = vpop.f32.mrf.mxu0
        %v629 = vadd.f32 0.0, %v628
        %v630 = vpop.f32.mrf.mxu0
        %v631 = vadd.f32 0.0, %v630
        %632 = vdwg.mxu0
        %633 = vmatpush.bf16.msra.mxu0 0
        %634 = vmatpush.bf16.msra.mxu0 0
        %635 = vmatpush.bf16.msra.mxu0 0
        %636 = vmatpush.bf16.msra.mxu0 0
        %637 = vmatpush.bf16.msra.mxu0 0
        %638 = vmatpush.bf16.msra.mxu0 0
        %639 = vmatpush.bf16.msra.mxu0 %v382
        %640 = vmatpush.bf16.msra.mxu0 %v380
        %641 = vmatmul.bf16.gmra.mxu0 %v497
        %v642 = vpop.f32.mrf.mxu0
        %v643 = vadd.f32 0.0, %v642
        %v644 = vpop.f32.mrf.mxu0
        %v645 = vadd.f32 0.0, %v644
        %646 = vmatmul.bf16.gmra.mxu0 %v500
        %v647 = vpop.f32.mrf.mxu0
        %v648 = vadd.f32 0.0, %v647
        %v649 = vpop.f32.mrf.mxu0
        %v650 = vadd.f32 0.0, %v649
        %651 = vmatmul.bf16.gmra.mxu0 %v503
        %v652 = vpop.f32.mrf.mxu0
        %v653 = vadd.f32 0.0, %v652
        %v654 = vpop.f32.mrf.mxu0
        %v655 = vadd.f32 0.0, %v654
        %656 = vmatmul.bf16.gmra.mxu0 %v506
        %v657 = vpop.f32.mrf.mxu0
        %v658 = vadd.f32 0.0, %v657
        %v659 = vpop.f32.mrf.mxu0
        %v660 = vadd.f32 0.0, %v659
        %661 = vmatmul.bf16.gmra.mxu0 %v509
        %v662 = vpop.f32.mrf.mxu0
        %v663 = vadd.f32 0.0, %v662
        %v664 = vpop.f32.mrf.mxu0
        %v665 = vadd.f32 0.0, %v664
        %666 = vmatmul.bf16.gmra.mxu0 %v512
        %v667 = vpop.f32.mrf.mxu0
        %v668 = vadd.f32 0.0, %v667
        %v669 = vpop.f32.mrf.mxu0
        %v670 = vadd.f32 0.0, %v669
        %671 = vmatmul.bf16.gmra.mxu0 %v515
        %v672 = vpop.f32.mrf.mxu0
        %v673 = vadd.f32 0.0, %v672
        %v674 = vpop.f32.mrf.mxu0
        %v675 = vadd.f32 0.0, %v674
        %676 = vmatmul.bf16.gmra.mxu0 %v518
        %v677 = vpop.f32.mrf.mxu0
        %v678 = vadd.f32 0.0, %v677
        %v679 = vpop.f32.mrf.mxu0
        %v680 = vadd.f32 0.0, %v679
        %681 = vmatmul.bf16.gmra.mxu0 %v521
        %v682 = vpop.f32.mrf.mxu0
        %v683 = vadd.f32 0.0, %v682
        %v684 = vpop.f32.mrf.mxu0
        %v685 = vadd.f32 0.0, %v684
        %686 = vmatmul.bf16.gmra.mxu0 %v524
        %v687 = vpop.f32.mrf.mxu0
        %v688 = vadd.f32 0.0, %v687
        %v689 = vpop.f32.mrf.mxu0
        %v690 = vadd.f32 0.0, %v689
        %691 = vmatmul.bf16.gmra.mxu0 %v527
        %v692 = vpop.f32.mrf.mxu0
        %v693 = vadd.f32 0.0, %v692
        %v694 = vpop.f32.mrf.mxu0
        %v695 = vadd.f32 0.0, %v694
        %696 = vmatmul.bf16.gmra.mxu0 %v530
        %v697 = vpop.f32.mrf.mxu0
        %v698 = vadd.f32 0.0, %v697
        %v699 = vpop.f32.mrf.mxu0
        %v700 = vadd.f32 0.0, %v699
        %701 = vmatmul.bf16.gmra.mxu0 %v533
        %v702 = vpop.f32.mrf.mxu0
        %v703 = vadd.f32 0.0, %v702
        %v704 = vpop.f32.mrf.mxu0
        %v705 = vadd.f32 0.0, %v704
        %706 = vmatmul.bf16.gmra.mxu0 %v536
        %v707 = vpop.f32.mrf.mxu0
        %v708 = vadd.f32 0.0, %v707
        %v709 = vpop.f32.mrf.mxu0
        %v710 = vadd.f32 0.0, %v709
        %711 = vmatmul.bf16.gmra.mxu0 %v539
        %v712 = vpop.f32.mrf.mxu0
        %v713 = vadd.f32 0.0, %v712
        %v714 = vpop.f32.mrf.mxu0
        %v715 = vadd.f32 0.0, %v714
        %716 = vmatmul.bf16.gmra.mxu0 %v542
        %v717 = vpop.f32.mrf.mxu0
        %v718 = vadd.f32 0.0, %v717
        %v719 = vpop.f32.mrf.mxu0
        %v720 = vadd.f32 0.0, %v719
        %721 = vdwg.mxu0
        %v722 = vpack.c.bf16 %v643, %v554
        %v723 = vpack.c.bf16 %v645, %v556
        %v724 = vpack.c.bf16 %v648, %v559
        %v725 = vpack.c.bf16 %v650, %v561
        %v726 = vpack.c.bf16 %v653, %v564
        %v727 = vpack.c.bf16 %v655, %v566
        %v728 = vpack.c.bf16 %v658, %v569
        %v729 = vpack.c.bf16 %v660, %v571
        %v730 = vpack.c.bf16 %v663, %v574
        %v731 = vpack.c.bf16 %v665, %v576
        %v732 = vpack.c.bf16 %v668, %v579
        %v733 = vpack.c.bf16 %v670, %v581
        %v734 = vpack.c.bf16 %v673, %v584
        %v735 = vpack.c.bf16 %v675, %v586
        %v736 = vpack.c.bf16 %v678, %v589
        %v737 = vpack.c.bf16 %v680, %v591
        %v738 = vpack.c.bf16 %v683, %v594
        %v739 = vpack.c.bf16 %v685, %v596
        %v740 = vpack.c.bf16 %v688, %v599
        %v741 = vpack.c.bf16 %v690, %v601
        %v742 = vpack.c.bf16 %v693, %v604
        %v743 = vpack.c.bf16 %v695, %v606
        %v744 = vpack.c.bf16 %v698, %v609
        %v745 = vpack.c.bf16 %v700, %v611
        %v746 = vpack.c.bf16 %v703, %v614
        %v747 = vpack.c.bf16 %v705, %v616
        %v748 = vpack.c.bf16 %v708, %v619
        %v749 = vpack.c.bf16 %v710, %v621
        %v750 = vpack.c.bf16 %v713, %v624
        %v751 = vpack.c.bf16 %v715, %v626
        %v752 = vpack.c.bf16 %v718, %v629
        %v753 = vpack.c.bf16 %v720, %v631
        %v754 = vld [vmem:[%s2] sm:$0xf]
        %v755 = vld [vmem:[%s2 + $0x4] sm:$0xf]
        %v756 = vld [vmem:[%s2 + $0x8] sm:$0xf]
        %v757 = vld [vmem:[%s2 + $0xc] sm:$0xf]
        %v758 = vld [vmem:[%s2 + $0x10] sm:$0xf]
        %v759 = vld [vmem:[%s2 + $0x14] sm:$0xf]
        %v760 = vld [vmem:[%s2 + $0x18] sm:$0xf]
        %v761 = vld [vmem:[%s2 + $0x1c] sm:$0xf]
        %v762 = vld [vmem:[%s2 + $0x20] sm:$0xf]
        %v763 = vld [vmem:[%s2 + $0x24] sm:$0xf]
        %v764 = vld [vmem:[%s2 + $0x28] sm:$0xf]
        %v765 = vld [vmem:[%s2 + $0x2c] sm:$0xf]
        %v766 = vld [vmem:[%s2 + $0x30] sm:$0xf]
        %v767 = vld [vmem:[%s2 + $0x34] sm:$0xf]
        %v768 = vld [vmem:[%s2 + $0x38] sm:$0xf]
        %v769 = vld [vmem:[%s2 + $0x3c] sm:$0xf]
        %v770 = vld [vmem:[%s2 + $0x40] sm:$0xf]
        %v771 = vld [vmem:[%s2 + $0x44] sm:$0xf]
        %v772 = vld [vmem:[%s2 + $0x48] sm:$0xf]
        %v773 = vld [vmem:[%s2 + $0x4c] sm:$0xf]
        %v774 = vld [vmem:[%s2 + $0x50] sm:$0xf]
        %v775 = vld [vmem:[%s2 + $0x54] sm:$0xf]
        %v776 = vld [vmem:[%s2 + $0x58] sm:$0xf]
        %v777 = vld [vmem:[%s2 + $0x5c] sm:$0xf]
        %v778 = vld [vmem:[%s2 + $0x60] sm:$0xf]
        %v779 = vld [vmem:[%s2 + $0x64] sm:$0xf]
        %v780 = vld [vmem:[%s2 + $0x68] sm:$0xf]
        %v781 = vld [vmem:[%s2 + $0x6c] sm:$0xf]
        %v782 = vld [vmem:[%s2 + $0x70] sm:$0xf]
        %v783 = vld [vmem:[%s2 + $0x74] sm:$0xf]
        %v784 = vld [vmem:[%s2 + $0x78] sm:$0xf]
        %v785 = vld [vmem:[%s2 + $0x7c] sm:$0xf]
        %787 = vset.pattern.permute.xlu0 0
        %788 = vperm.xlu0 %787, %v754
        %v789 = vpop.permute.xlu0 %788
        %v792 = vunpack.c.l.s4 839922192
        %v793 = vunpack.c.0.s8 %v792
        %v794 = vperm.slane %v789, %v793
        %796 = vset.pattern.permute.xlu0 0
        %797 = vperm.xlu0 %796, %v755
        %v798 = vpop.permute.xlu0 %797
        %v801 = vunpack.c.l.s4 839922192
        %v802 = vunpack.c.0.s8 %v801
        %v803 = vperm.slane %v798, %v802
        %805 = vset.pattern.permute.xlu0 0
        %806 = vperm.xlu0 %805, %v756
        %v807 = vpop.permute.xlu0 %806
        %v810 = vunpack.c.l.s4 839922192
        %v811 = vunpack.c.0.s8 %v810
        %v812 = vperm.slane %v807, %v811
        %814 = vset.pattern.permute.xlu0 0
        %815 = vperm.xlu0 %814, %v757
        %v816 = vpop.permute.xlu0 %815
        %v819 = vunpack.c.l.s4 839922192
        %v820 = vunpack.c.0.s8 %v819
        %v821 = vperm.slane %v816, %v820
        %823 = vset.pattern.permute.xlu0 0
        %824 = vperm.xlu0 %823, %v758
        %v825 = vpop.permute.xlu0 %824
        %v828 = vunpack.c.l.s4 839922192
        %v829 = vunpack.c.0.s8 %v828
        %v830 = vperm.slane %v825, %v829
        %832 = vset.pattern.permute.xlu0 0
        %833 = vperm.xlu0 %832, %v759
        %v834 = vpop.permute.xlu0 %833
        %v837 = vunpack.c.l.s4 839922192
        %v838 = vunpack.c.0.s8 %v837
        %v839 = vperm.slane %v834, %v838
        %841 = vset.pattern.permute.xlu0 0
        %842 = vperm.xlu0 %841, %v760
        %v843 = vpop.permute.xlu0 %842
        %v846 = vunpack.c.l.s4 839922192
        %v847 = vunpack.c.0.s8 %v846
        %v848 = vperm.slane %v843, %v847
        %850 = vset.pattern.permute.xlu0 0
        %851 = vperm.xlu0 %850, %v761
        %v852 = vpop.permute.xlu0 %851
        %v855 = vunpack.c.l.s4 839922192
        %v856 = vunpack.c.0.s8 %v855
        %v857 = vperm.slane %v852, %v856
        %859 = vset.pattern.permute.xlu0 0
        %860 = vperm.xlu0 %859, %v762
        %v861 = vpop.permute.xlu0 %860
        %v864 = vunpack.c.l.s4 839922192
        %v865 = vunpack.c.0.s8 %v864
        %v866 = vperm.slane %v861, %v865
        %868 = vset.pattern.permute.xlu0 0
        %869 = vperm.xlu0 %868, %v763
        %v870 = vpop.permute.xlu0 %869
        %v873 = vunpack.c.l.s4 839922192
        %v874 = vunpack.c.0.s8 %v873
        %v875 = vperm.slane %v870, %v874
        %877 = vset.pattern.permute.xlu0 0
        %878 = vperm.xlu0 %877, %v764
        %v879 = vpop.permute.xlu0 %878
        %v882 = vunpack.c.l.s4 839922192
        %v883 = vunpack.c.0.s8 %v882
        %v884 = vperm.slane %v879, %v883
        %886 = vset.pattern.permute.xlu0 0
        %887 = vperm.xlu0 %886, %v765
        %v888 = vpop.permute.xlu0 %887
        %v891 = vunpack.c.l.s4 839922192
        %v892 = vunpack.c.0.s8 %v891
        %v893 = vperm.slane %v888, %v892
        %895 = vset.pattern.permute.xlu0 0
        %896 = vperm.xlu0 %895, %v766
        %v897 = vpop.permute.xlu0 %896
        %v900 = vunpack.c.l.s4 839922192
        %v901 = vunpack.c.0.s8 %v900
        %v902 = vperm.slane %v897, %v901
        %904 = vset.pattern.permute.xlu0 0
        %905 = vperm.xlu0 %904, %v767
        %v906 = vpop.permute.xlu0 %905
        %v909 = vunpack.c.l.s4 839922192
        %v910 = vunpack.c.0.s8 %v909
        %v911 = vperm.slane %v906, %v910
        %913 = vset.pattern.permute.xlu0 0
        %914 = vperm.xlu0 %913, %v768
        %v915 = vpop.permute.xlu0 %914
        %v918 = vunpack.c.l.s4 839922192
        %v919 = vunpack.c.0.s8 %v918
        %v920 = vperm.slane %v915, %v919
        %922 = vset.pattern.permute.xlu0 0
        %923 = vperm.xlu0 %922, %v769
        %v924 = vpop.permute.xlu0 %923
        %v927 = vunpack.c.l.s4 839922192
        %v928 = vunpack.c.0.s8 %v927
        %v929 = vperm.slane %v924, %v928
        %931 = vset.pattern.permute.xlu0 0
        %932 = vperm.xlu0 %931, %v770
        %v933 = vpop.permute.xlu0 %932
        %v936 = vunpack.c.l.s4 839922192
        %v937 = vunpack.c.0.s8 %v936
        %v938 = vperm.slane %v933, %v937
        %940 = vset.pattern.permute.xlu0 0
        %941 = vperm.xlu0 %940, %v771
        %v942 = vpop.permute.xlu0 %941
        %v945 = vunpack.c.l.s4 839922192
        %v946 = vunpack.c.0.s8 %v945
        %v947 = vperm.slane %v942, %v946
        %949 = vset.pattern.permute.xlu0 0
        %950 = vperm.xlu0 %949, %v772
        %v951 = vpop.permute.xlu0 %950
        %v954 = vunpack.c.l.s4 839922192
        %v955 = vunpack.c.0.s8 %v954
        %v956 = vperm.slane %v951, %v955
        %958 = vset.pattern.permute.xlu0 0
        %959 = vperm.xlu0 %958, %v773
        %v960 = vpop.permute.xlu0 %959
        %v963 = vunpack.c.l.s4 839922192
        %v964 = vunpack.c.0.s8 %v963
        %v965 = vperm.slane %v960, %v964
        %967 = vset.pattern.permute.xlu0 0
        %968 = vperm.xlu0 %967, %v774
        %v969 = vpop.permute.xlu0 %968
        %v972 = vunpack.c.l.s4 839922192
        %v973 = vunpack.c.0.s8 %v972
        %v974 = vperm.slane %v969, %v973
        %976 = vset.pattern.permute.xlu0 0
        %977 = vperm.xlu0 %976, %v775
        %v978 = vpop.permute.xlu0 %977
        %v981 = vunpack.c.l.s4 839922192
        %v982 = vunpack.c.0.s8 %v981
        %v983 = vperm.slane %v978, %v982
        %985 = vset.pattern.permute.xlu0 0
        %986 = vperm.xlu0 %985, %v776
        %v987 = vpop.permute.xlu0 %986
        %v990 = vunpack.c.l.s4 839922192
        %v991 = vunpack.c.0.s8 %v990
        %v992 = vperm.slane %v987, %v991
        %994 = vset.pattern.permute.xlu0 0
        %995 = vperm.xlu0 %994, %v777
        %v996 = vpop.permute.xlu0 %995
        %v999 = vunpack.c.l.s4 839922192
        %v1000 = vunpack.c.0.s8 %v999
        %v1001 = vperm.slane %v996, %v1000
        %1003 = vset.pattern.permute.xlu0 0
        %1004 = vperm.xlu0 %1003, %v778
        %v1005 = vpop.permute.xlu0 %1004
        %v1008 = vunpack.c.l.s4 839922192
        %v1009 = vunpack.c.0.s8 %v1008
        %v1010 = vperm.slane %v1005, %v1009
        %1012 = vset.pattern.permute.xlu0 0
        %1013 = vperm.xlu0 %1012, %v779
        %v1014 = vpop.permute.xlu0 %1013
        %v1017 = vunpack.c.l.s4 839922192
        %v1018 = vunpack.c.0.s8 %v1017
        %v1019 = vperm.slane %v1014, %v1018
        %1021 = vset.pattern.permute.xlu0 0
        %1022 = vperm.xlu0 %1021, %v780
        %v1023 = vpop.permute.xlu0 %1022
        %v1026 = vunpack.c.l.s4 839922192
        %v1027 = vunpack.c.0.s8 %v1026
        %v1028 = vperm.slane %v1023, %v1027
        %1030 = vset.pattern.permute.xlu0 0
        %1031 = vperm.xlu0 %1030, %v781
        %v1032 = vpop.permute.xlu0 %1031
        %v1035 = vunpack.c.l.s4 839922192
        %v1036 = vunpack.c.0.s8 %v1035
        %v1037 = vperm.slane %v1032, %v1036
        %1039 = vset.pattern.permute.xlu0 0
        %1040 = vperm.xlu0 %1039, %v782
        %v1041 = vpop.permute.xlu0 %1040
        %v1044 = vunpack.c.l.s4 839922192
        %v1045 = vunpack.c.0.s8 %v1044
        %v1046 = vperm.slane %v1041, %v1045
        %1048 = vset.pattern.permute.xlu0 0
        %1049 = vperm.xlu0 %1048, %v783
        %v1050 = vpop.permute.xlu0 %1049
        %v1053 = vunpack.c.l.s4 839922192
        %v1054 = vunpack.c.0.s8 %v1053
        %v1055 = vperm.slane %v1050, %v1054
        %1057 = vset.pattern.permute.xlu0 0
        %1058 = vperm.xlu0 %1057, %v784
        %v1059 = vpop.permute.xlu0 %1058
        %v1062 = vunpack.c.l.s4 839922192
        %v1063 = vunpack.c.0.s8 %v1062
        %v1064 = vperm.slane %v1059, %v1063
        %1066 = vset.pattern.permute.xlu0 0
        %1067 = vperm.xlu0 %1066, %v785
        %v1068 = vpop.permute.xlu0 %1067
        %v1071 = vunpack.c.l.s4 839922192
        %v1072 = vunpack.c.0.s8 %v1071
        %v1073 = vperm.slane %v1068, %v1072
        %v1074 = vunpack.c.l.bf16 %v722
        %v1075 = vunpack.c.h.bf16 %v722
        %v1076 = vunpack.c.l.bf16 %v723
        %v1077 = vunpack.c.h.bf16 %v723
        %v1078 = vunpack.c.l.bf16 %v724
        %v1079 = vunpack.c.h.bf16 %v724
        %v1080 = vunpack.c.l.bf16 %v725
        %v1081 = vunpack.c.h.bf16 %v725
        %v1082 = vunpack.c.l.bf16 %v726
        %v1083 = vunpack.c.h.bf16 %v726
        %v1084 = vunpack.c.l.bf16 %v727
        %v1085 = vunpack.c.h.bf16 %v727
        %v1086 = vunpack.c.l.bf16 %v728
        %v1087 = vunpack.c.h.bf16 %v728
        %v1088 = vunpack.c.l.bf16 %v729
        %v1089 = vunpack.c.h.bf16 %v729
        %v1090 = vunpack.c.l.bf16 %v730
        %v1091 = vunpack.c.h.bf16 %v730
        %v1092 = vunpack.c.l.bf16 %v731
        %v1093 = vunpack.c.h.bf16 %v731
        %v1094 = vunpack.c.l.bf16 %v732
        %v1095 = vunpack.c.h.bf16 %v732
        %v1096 = vunpack.c.l.bf16 %v733
        %v1097 = vunpack.c.h.bf16 %v733
        %v1098 = vunpack.c.l.bf16 %v734
        %v1099 = vunpack.c.h.bf16 %v734
        %v1100 = vunpack.c.l.bf16 %v735
        %v1101 = vunpack.c.h.bf16 %v735
        %v1102 = vunpack.c.l.bf16 %v736
        %v1103 = vunpack.c.h.bf16 %v736
        %v1104 = vunpack.c.l.bf16 %v737
        %v1105 = vunpack.c.h.bf16 %v737
        %v1106 = vunpack.c.l.bf16 %v738
        %v1107 = vunpack.c.h.bf16 %v738
        %v1108 = vunpack.c.l.bf16 %v739
        %v1109 = vunpack.c.h.bf16 %v739
        %v1110 = vunpack.c.l.bf16 %v740
        %v1111 = vunpack.c.h.bf16 %v740
        %v1112 = vunpack.c.l.bf16 %v741
        %v1113 = vunpack.c.h.bf16 %v741
        %v1114 = vunpack.c.l.bf16 %v742
        %v1115 = vunpack.c.h.bf16 %v742
        %v1116 = vunpack.c.l.bf16 %v743
        %v1117 = vunpack.c.h.bf16 %v743
        %v1118 = vunpack.c.l.bf16 %v744
        %v1119 = vunpack.c.h.bf16 %v744
        %v1120 = vunpack.c.l.bf16 %v745
        %v1121 = vunpack.c.h.bf16 %v745
        %v1122 = vunpack.c.l.bf16 %v746
        %v1123 = vunpack.c.h.bf16 %v746
        %v1124 = vunpack.c.l.bf16 %v747
        %v1125 = vunpack.c.h.bf16 %v747
        %v1126 = vunpack.c.l.bf16 %v748
        %v1127 = vunpack.c.h.bf16 %v748
        %v1128 = vunpack.c.l.bf16 %v749
        %v1129 = vunpack.c.h.bf16 %v749
        %v1130 = vunpack.c.l.bf16 %v750
        %v1131 = vunpack.c.h.bf16 %v750
        %v1132 = vunpack.c.l.bf16 %v751
        %v1133 = vunpack.c.h.bf16 %v751
        %v1134 = vunpack.c.l.bf16 %v752
        %v1135 = vunpack.c.h.bf16 %v752
        %v1136 = vunpack.c.l.bf16 %v753
        %v1137 = vunpack.c.h.bf16 %v753
        %v1138 = vunpack.c.l.bf16 %v794
        %v1139 = vunpack.c.l.bf16 %v803
        %v1140 = vunpack.c.l.bf16 %v812
        %v1141 = vunpack.c.l.bf16 %v821
        %v1142 = vunpack.c.l.bf16 %v830
        %v1143 = vunpack.c.l.bf16 %v839
        %v1144 = vunpack.c.l.bf16 %v848
        %v1145 = vunpack.c.l.bf16 %v857
        %v1146 = vunpack.c.l.bf16 %v866
        %v1147 = vunpack.c.l.bf16 %v875
        %v1148 = vunpack.c.l.bf16 %v884
        %v1149 = vunpack.c.l.bf16 %v893
        %v1150 = vunpack.c.l.bf16 %v902
        %v1151 = vunpack.c.l.bf16 %v911
        %v1152 = vunpack.c.l.bf16 %v920
        %v1153 = vunpack.c.l.bf16 %v929
        %v1154 = vunpack.c.l.bf16 %v938
        %v1155 = vunpack.c.l.bf16 %v947
        %v1156 = vunpack.c.l.bf16 %v956
        %v1157 = vunpack.c.l.bf16 %v965
        %v1158 = vunpack.c.l.bf16 %v974
        %v1159 = vunpack.c.l.bf16 %v983
        %v1160 = vunpack.c.l.bf16 %v992
        %v1161 = vunpack.c.l.bf16 %v1001
        %v1162 = vunpack.c.l.bf16 %v1010
        %v1163 = vunpack.c.l.bf16 %v1019
        %v1164 = vunpack.c.l.bf16 %v1028
        %v1165 = vunpack.c.l.bf16 %v1037
        %v1166 = vunpack.c.l.bf16 %v1046
        %v1167 = vunpack.c.l.bf16 %v1055
        %v1168 = vunpack.c.l.bf16 %v1064
        %v1169 = vunpack.c.l.bf16 %v1073
        %v1170 = vadd.f32 %v1074, %v1138
        %v1171 = vadd.f32 %v1075, %v1138
        %v1172 = vadd.f32 %v1076, %v1139
        %v1173 = vadd.f32 %v1077, %v1139
        %v1174 = vadd.f32 %v1078, %v1140
        %v1175 = vadd.f32 %v1079, %v1140
        %v1176 = vadd.f32 %v1080, %v1141
        %v1177 = vadd.f32 %v1081, %v1141
        %v1178 = vadd.f32 %v1082, %v1142
        %v1179 = vadd.f32 %v1083, %v1142
        %v1180 = vadd.f32 %v1084, %v1143
        %v1181 = vadd.f32 %v1085, %v1143
        %v1182 = vadd.f32 %v1086, %v1144
        %v1183 = vadd.f32 %v1087, %v1144
        %v1184 = vadd.f32 %v1088, %v1145
        %v1185 = vadd.f32 %v1089, %v1145
        %v1186 = vadd.f32 %v1090, %v1146
        %v1187 = vadd.f32 %v1091, %v1146
        %v1188 = vadd.f32 %v1092, %v1147
        %v1189 = vadd.f32 %v1093, %v1147
        %v1190 = vadd.f32 %v1094, %v1148
        %v1191 = vadd.f32 %v1095, %v1148
        %v1192 = vadd.f32 %v1096, %v1149
        %v1193 = vadd.f32 %v1097, %v1149
        %v1194 = vadd.f32 %v1098, %v1150
        %v1195 = vadd.f32 %v1099, %v1150
        %v1196 = vadd.f32 %v1100, %v1151
        %v1197 = vadd.f32 %v1101, %v1151
        %v1198 = vadd.f32 %v1102, %v1152
        %v1199 = vadd.f32 %v1103, %v1152
        %v1200 = vadd.f32 %v1104, %v1153
        %v1201 = vadd.f32 %v1105, %v1153
        %v1202 = vadd.f32 %v1106, %v1154
        %v1203 = vadd.f32 %v1107, %v1154
        %v1204 = vadd.f32 %v1108, %v1155
        %v1205 = vadd.f32 %v1109, %v1155
        %v1206 = vadd.f32 %v1110, %v1156
        %v1207 = vadd.f32 %v1111, %v1156
        %v1208 = vadd.f32 %v1112, %v1157
        %v1209 = vadd.f32 %v1113, %v1157
        %v1210 = vadd.f32 %v1114, %v1158
        %v1211 = vadd.f32 %v1115, %v1158
        %v1212 = vadd.f32 %v1116, %v1159
        %v1213 = vadd.f32 %v1117, %v1159
        %v1214 = vadd.f32 %v1118, %v1160
        %v1215 = vadd.f32 %v1119, %v1160
        %v1216 = vadd.f32 %v1120, %v1161
        %v1217 = vadd.f32 %v1121, %v1161
        %v1218 = vadd.f32 %v1122, %v1162
        %v1219 = vadd.f32 %v1123, %v1162
        %v1220 = vadd.f32 %v1124, %v1163
        %v1221 = vadd.f32 %v1125, %v1163
        %v1222 = vadd.f32 %v1126, %v1164
        %v1223 = vadd.f32 %v1127, %v1164
        %v1224 = vadd.f32 %v1128, %v1165
        %v1225 = vadd.f32 %v1129, %v1165
        %v1226 = vadd.f32 %v1130, %v1166
        %v1227 = vadd.f32 %v1131, %v1166
        %v1228 = vadd.f32 %v1132, %v1167
        %v1229 = vadd.f32 %v1133, %v1167
        %v1230 = vadd.f32 %v1134, %v1168
        %v1231 = vadd.f32 %v1135, %v1168
        %v1232 = vadd.f32 %v1136, %v1169
        %v1233 = vadd.f32 %v1137, %v1169
        %v1234 = vpack.c.bf16 %v1171, %v1170
        %v1235 = vpack.c.bf16 %v1173, %v1172
        %v1236 = vpack.c.bf16 %v1175, %v1174
        %v1237 = vpack.c.bf16 %v1177, %v1176
        %v1238 = vpack.c.bf16 %v1179, %v1178
        %v1239 = vpack.c.bf16 %v1181, %v1180
        %v1240 = vpack.c.bf16 %v1183, %v1182
        %v1241 = vpack.c.bf16 %v1185, %v1184
        %v1242 = vpack.c.bf16 %v1187, %v1186
        %v1243 = vpack.c.bf16 %v1189, %v1188
        %v1244 = vpack.c.bf16 %v1191, %v1190
        %v1245 = vpack.c.bf16 %v1193, %v1192
        %v1246 = vpack.c.bf16 %v1195, %v1194
        %v1247 = vpack.c.bf16 %v1197, %v1196
        %v1248 = vpack.c.bf16 %v1199, %v1198
        %v1249 = vpack.c.bf16 %v1201, %v1200
        %v1250 = vpack.c.bf16 %v1203, %v1202
        %v1251 = vpack.c.bf16 %v1205, %v1204
        %v1252 = vpack.c.bf16 %v1207, %v1206
        %v1253 = vpack.c.bf16 %v1209, %v1208
        %v1254 = vpack.c.bf16 %v1211, %v1210
        %v1255 = vpack.c.bf16 %v1213, %v1212
        %v1256 = vpack.c.bf16 %v1215, %v1214
        %v1257 = vpack.c.bf16 %v1217, %v1216
        %v1258 = vpack.c.bf16 %v1219, %v1218
        %v1259 = vpack.c.bf16 %v1221, %v1220
        %v1260 = vpack.c.bf16 %v1223, %v1222
        %v1261 = vpack.c.bf16 %v1225, %v1224
        %v1262 = vpack.c.bf16 %v1227, %v1226
        %v1263 = vpack.c.bf16 %v1229, %v1228
        %v1264 = vpack.c.bf16 %v1231, %v1230
        %v1265 = vpack.c.bf16 %v1233, %v1232
        %v1266 = vunpack.c.l.bf16 %v1234
        %v1267 = vunpack.c.h.bf16 %v1234
        %v1268 = vunpack.c.l.bf16 %v1235
        %v1269 = vunpack.c.h.bf16 %v1235
        %v1270 = vunpack.c.l.bf16 %v1236
        %v1271 = vunpack.c.h.bf16 %v1236
        %v1272 = vunpack.c.l.bf16 %v1237
        %v1273 = vunpack.c.h.bf16 %v1237
        %v1274 = vunpack.c.l.bf16 %v1238
        %v1275 = vunpack.c.h.bf16 %v1238
        %v1276 = vunpack.c.l.bf16 %v1239
        %v1277 = vunpack.c.h.bf16 %v1239
        %v1278 = vunpack.c.l.bf16 %v1240
        %v1279 = vunpack.c.h.bf16 %v1240
        %v1280 = vunpack.c.l.bf16 %v1241
        %v1281 = vunpack.c.h.bf16 %v1241
        %v1282 = vunpack.c.l.bf16 %v1242
        %v1283 = vunpack.c.h.bf16 %v1242
        %v1284 = vunpack.c.l.bf16 %v1243
        %v1285 = vunpack.c.h.bf16 %v1243
        %v1286 = vunpack.c.l.bf16 %v1244
        %v1287 = vunpack.c.h.bf16 %v1244
        %v1288 = vunpack.c.l.bf16 %v1245
        %v1289 = vunpack.c.h.bf16 %v1245
        %v1290 = vunpack.c.l.bf16 %v1246
        %v1291 = vunpack.c.h.bf16 %v1246
        %v1292 = vunpack.c.l.bf16 %v1247
        %v1293 = vunpack.c.h.bf16 %v1247
        %v1294 = vunpack.c.l.bf16 %v1248
        %v1295 = vunpack.c.h.bf16 %v1248
        %v1296 = vunpack.c.l.bf16 %v1249
        %v1297 = vunpack.c.h.bf16 %v1249
        %v1298 = vunpack.c.l.bf16 %v1250
        %v1299 = vunpack.c.h.bf16 %v1250
        %v1300 = vunpack.c.l.bf16 %v1251
        %v1301 = vunpack.c.h.bf16 %v1251
        %v1302 = vunpack.c.l.bf16 %v1252
        %v1303 = vunpack.c.h.bf16 %v1252
        %v1304 = vunpack.c.l.bf16 %v1253
        %v1305 = vunpack.c.h.bf16 %v1253
        %v1306 = vunpack.c.l.bf16 %v1254
        %v1307 = vunpack.c.h.bf16 %v1254
        %v1308 = vunpack.c.l.bf16 %v1255
        %v1309 = vunpack.c.h.bf16 %v1255
        %v1310 = vunpack.c.l.bf16 %v1256
        %v1311 = vunpack.c.h.bf16 %v1256
        %v1312 = vunpack.c.l.bf16 %v1257
        %v1313 = vunpack.c.h.bf16 %v1257
        %v1314 = vunpack.c.l.bf16 %v1258
        %v1315 = vunpack.c.h.bf16 %v1258
        %v1316 = vunpack.c.l.bf16 %v1259
        %v1317 = vunpack.c.h.bf16 %v1259
        %v1318 = vunpack.c.l.bf16 %v1260
        %v1319 = vunpack.c.h.bf16 %v1260
        %v1320 = vunpack.c.l.bf16 %v1261
        %v1321 = vunpack.c.h.bf16 %v1261
        %v1322 = vunpack.c.l.bf16 %v1262
        %v1323 = vunpack.c.h.bf16 %v1262
        %v1324 = vunpack.c.l.bf16 %v1263
        %v1325 = vunpack.c.h.bf16 %v1263
        %v1326 = vunpack.c.l.bf16 %v1264
        %v1327 = vunpack.c.h.bf16 %v1264
        %v1328 = vunpack.c.l.bf16 %v1265
        %v1329 = vunpack.c.h.bf16 %v1265
        %v1330 = vmul.f32 %v1266, 0.20019531
        %v1331 = vmul.f32 %v1267, 0.20019531
        %v1332 = vmul.f32 %v1268, 0.20019531
        %v1333 = vmul.f32 %v1269, 0.20019531
        %v1334 = vmul.f32 %v1270, 0.20019531
        %v1335 = vmul.f32 %v1271, 0.20019531
        %v1336 = vmul.f32 %v1272, 0.20019531
        %v1337 = vmul.f32 %v1273, 0.20019531
        %v1338 = vmul.f32 %v1274, 0.20019531
        %v1339 = vmul.f32 %v1275, 0.20019531
        %v1340 = vmul.f32 %v1276, 0.20019531
        %v1341 = vmul.f32 %v1277, 0.20019531
        %v1342 = vmul.f32 %v1278, 0.20019531
        %v1343 = vmul.f32 %v1279, 0.20019531
        %v1344 = vmul.f32 %v1280, 0.20019531
        %v1345 = vmul.f32 %v1281, 0.20019531
        %v1346 = vmul.f32 %v1282, 0.20019531
        %v1347 = vmul.f32 %v1283, 0.20019531
        %v1348 = vmul.f32 %v1284, 0.20019531
        %v1349 = vmul.f32 %v1285, 0.20019531
        %v1350 = vmul.f32 %v1286, 0.20019531
        %v1351 = vmul.f32 %v1287, 0.20019531
        %v1352 = vmul.f32 %v1288, 0.20019531
        %v1353 = vmul.f32 %v1289, 0.20019531
        %v1354 = vmul.f32 %v1290, 0.20019531
        %v1355 = vmul.f32 %v1291, 0.20019531
        %v1356 = vmul.f32 %v1292, 0.20019531
        %v1357 = vmul.f32 %v1293, 0.20019531
        %v1358 = vmul.f32 %v1294, 0.20019531
        %v1359 = vmul.f32 %v1295, 0.20019531
        %v1360 = vmul.f32 %v1296, 0.20019531
        %v1361 = vmul.f32 %v1297, 0.20019531
        %v1362 = vmul.f32 %v1298, 0.20019531
        %v1363 = vmul.f32 %v1299, 0.20019531
        %v1364 = vmul.f32 %v1300, 0.20019531
        %v1365 = vmul.f32 %v1301, 0.20019531
        %v1366 = vmul.f32 %v1302, 0.20019531
        %v1367 = vmul.f32 %v1303, 0.20019531
        %v1368 = vmul.f32 %v1304, 0.20019531
        %v1369 = vmul.f32 %v1305, 0.20019531
        %v1370 = vmul.f32 %v1306, 0.20019531
        %v1371 = vmul.f32 %v1307, 0.20019531
        %v1372 = vmul.f32 %v1308, 0.20019531
        %v1373 = vmul.f32 %v1309, 0.20019531
        %v1374 = vmul.f32 %v1310, 0.20019531
        %v1375 = vmul.f32 %v1311, 0.20019531
        %v1376 = vmul.f32 %v1312, 0.20019531
        %v1377 = vmul.f32 %v1313, 0.20019531
        %v1378 = vmul.f32 %v1314, 0.20019531
        %v1379 = vmul.f32 %v1315, 0.20019531
        %v1380 = vmul.f32 %v1316, 0.20019531
        %v1381 = vmul.f32 %v1317, 0.20019531
        %v1382 = vmul.f32 %v1318, 0.20019531
        %v1383 = vmul.f32 %v1319, 0.20019531
        %v1384 = vmul.f32 %v1320, 0.20019531
        %v1385 = vmul.f32 %v1321, 0.20019531
        %v1386 = vmul.f32 %v1322, 0.20019531
        %v1387 = vmul.f32 %v1323, 0.20019531
        %v1388 = vmul.f32 %v1324, 0.20019531
        %v1389 = vmul.f32 %v1325, 0.20019531
        %v1390 = vmul.f32 %v1326, 0.20019531
        %v1391 = vmul.f32 %v1327, 0.20019531
        %v1392 = vmul.f32 %v1328, 0.20019531
        %v1393 = vmul.f32 %v1329, 0.20019531
        %v1394 = vpack.c.bf16 %v1331, %v1330
        %v1395 = vpack.c.bf16 %v1333, %v1332
        %v1396 = vpack.c.bf16 %v1335, %v1334
        %v1397 = vpack.c.bf16 %v1337, %v1336
        %v1398 = vpack.c.bf16 %v1339, %v1338
        %v1399 = vpack.c.bf16 %v1341, %v1340
        %v1400 = vpack.c.bf16 %v1343, %v1342
        %v1401 = vpack.c.bf16 %v1345, %v1344
        %v1402 = vpack.c.bf16 %v1347, %v1346
        %v1403 = vpack.c.bf16 %v1349, %v1348
        %v1404 = vpack.c.bf16 %v1351, %v1350
        %v1405 = vpack.c.bf16 %v1353, %v1352
        %v1406 = vpack.c.bf16 %v1355, %v1354
        %v1407 = vpack.c.bf16 %v1357, %v1356
        %v1408 = vpack.c.bf16 %v1359, %v1358
        %v1409 = vpack.c.bf16 %v1361, %v1360
        %v1410 = vpack.c.bf16 %v1363, %v1362
        %v1411 = vpack.c.bf16 %v1365, %v1364
        %v1412 = vpack.c.bf16 %v1367, %v1366
        %v1413 = vpack.c.bf16 %v1369, %v1368
        %v1414 = vpack.c.bf16 %v1371, %v1370
        %v1415 = vpack.c.bf16 %v1373, %v1372
        %v1416 = vpack.c.bf16 %v1375, %v1374
        %v1417 = vpack.c.bf16 %v1377, %v1376
        %v1418 = vpack.c.bf16 %v1379, %v1378
        %v1419 = vpack.c.bf16 %v1381, %v1380
        %v1420 = vpack.c.bf16 %v1383, %v1382
        %v1421 = vpack.c.bf16 %v1385, %v1384
        %v1422 = vpack.c.bf16 %v1387, %v1386
        %v1423 = vpack.c.bf16 %v1389, %v1388
        %v1424 = vpack.c.bf16 %v1391, %v1390
        %v1425 = vpack.c.bf16 %v1393, %v1392
        %v1426 = vunpack.c.l.bf16 %v1394
        %v1427 = vunpack.c.h.bf16 %v1394
        %v1428 = vunpack.c.l.bf16 %v1395
        %v1429 = vunpack.c.h.bf16 %v1395
        %v1430 = vunpack.c.l.bf16 %v1396
        %v1431 = vunpack.c.h.bf16 %v1396
        %v1432 = vunpack.c.l.bf16 %v1397
        %v1433 = vunpack.c.h.bf16 %v1397
        %v1434 = vunpack.c.l.bf16 %v1398
        %v1435 = vunpack.c.h.bf16 %v1398
        %v1436 = vunpack.c.l.bf16 %v1399
        %v1437 = vunpack.c.h.bf16 %v1399
        %v1438 = vunpack.c.l.bf16 %v1400
        %v1439 = vunpack.c.h.bf16 %v1400
        %v1440 = vunpack.c.l.bf16 %v1401
        %v1441 = vunpack.c.h.bf16 %v1401
        %v1442 = vunpack.c.l.bf16 %v1402
        %v1443 = vunpack.c.h.bf16 %v1402
        %v1444 = vunpack.c.l.bf16 %v1403
        %v1445 = vunpack.c.h.bf16 %v1403
        %v1446 = vunpack.c.l.bf16 %v1404
        %v1447 = vunpack.c.h.bf16 %v1404
        %v1448 = vunpack.c.l.bf16 %v1405
        %v1449 = vunpack.c.h.bf16 %v1405
        %v1450 = vunpack.c.l.bf16 %v1406
        %v1451 = vunpack.c.h.bf16 %v1406
        %v1452 = vunpack.c.l.bf16 %v1407
        %v1453 = vunpack.c.h.bf16 %v1407
        %v1454 = vunpack.c.l.bf16 %v1408
        %v1455 = vunpack.c.h.bf16 %v1408
        %v1456 = vunpack.c.l.bf16 %v1409
        %v1457 = vunpack.c.h.bf16 %v1409
        %v1458 = vunpack.c.l.bf16 %v1410
        %v1459 = vunpack.c.h.bf16 %v1410
        %v1460 = vunpack.c.l.bf16 %v1411
        %v1461 = vunpack.c.h.bf16 %v1411
        %v1462 = vunpack.c.l.bf16 %v1412
        %v1463 = vunpack.c.h.bf16 %v1412
        %v1464 = vunpack.c.l.bf16 %v1413
        %v1465 = vunpack.c.h.bf16 %v1413
        %v1466 = vunpack.c.l.bf16 %v1414
        %v1467 = vunpack.c.h.bf16 %v1414
        %v1468 = vunpack.c.l.bf16 %v1415
        %v1469 = vunpack.c.h.bf16 %v1415
        %v1470 = vunpack.c.l.bf16 %v1416
        %v1471 = vunpack.c.h.bf16 %v1416
        %v1472 = vunpack.c.l.bf16 %v1417
        %v1473 = vunpack.c.h.bf16 %v1417
        %v1474 = vunpack.c.l.bf16 %v1418
        %v1475 = vunpack.c.h.bf16 %v1418
        %v1476 = vunpack.c.l.bf16 %v1419
        %v1477 = vunpack.c.h.bf16 %v1419
        %v1478 = vunpack.c.l.bf16 %v1420
        %v1479 = vunpack.c.h.bf16 %v1420
        %v1480 = vunpack.c.l.bf16 %v1421
        %v1481 = vunpack.c.h.bf16 %v1421
        %v1482 = vunpack.c.l.bf16 %v1422
        %v1483 = vunpack.c.h.bf16 %v1422
        %v1484 = vunpack.c.l.bf16 %v1423
        %v1485 = vunpack.c.h.bf16 %v1423
        %v1486 = vunpack.c.l.bf16 %v1424
        %v1487 = vunpack.c.h.bf16 %v1424
        %v1488 = vunpack.c.l.bf16 %v1425
        %v1489 = vunpack.c.h.bf16 %v1425
        %v1490 = vmax.f32 %v1266, %v1426
        %v1491 = vmax.f32 %v1267, %v1427
        %v1492 = vmax.f32 %v1268, %v1428
        %v1493 = vmax.f32 %v1269, %v1429
        %v1494 = vmax.f32 %v1270, %v1430
        %v1495 = vmax.f32 %v1271, %v1431
        %v1496 = vmax.f32 %v1272, %v1432
        %v1497 = vmax.f32 %v1273, %v1433
        %v1498 = vmax.f32 %v1274, %v1434
        %v1499 = vmax.f32 %v1275, %v1435
        %v1500 = vmax.f32 %v1276, %v1436
        %v1501 = vmax.f32 %v1277, %v1437
        %v1502 = vmax.f32 %v1278, %v1438
        %v1503 = vmax.f32 %v1279, %v1439
        %v1504 = vmax.f32 %v1280, %v1440
        %v1505 = vmax.f32 %v1281, %v1441
        %v1506 = vmax.f32 %v1282, %v1442
        %v1507 = vmax.f32 %v1283, %v1443
        %v1508 = vmax.f32 %v1284, %v1444
        %v1509 = vmax.f32 %v1285, %v1445
        %v1510 = vmax.f32 %v1286, %v1446
        %v1511 = vmax.f32 %v1287, %v1447
        %v1512 = vmax.f32 %v1288, %v1448
        %v1513 = vmax.f32 %v1289, %v1449
        %v1514 = vmax.f32 %v1290, %v1450
        %v1515 = vmax.f32 %v1291, %v1451
        %v1516 = vmax.f32 %v1292, %v1452
        %v1517 = vmax.f32 %v1293, %v1453
        %v1518 = vmax.f32 %v1294, %v1454
        %v1519 = vmax.f32 %v1295, %v1455
        %v1520 = vmax.f32 %v1296, %v1456
        %v1521 = vmax.f32 %v1297, %v1457
        %v1522 = vmax.f32 %v1298, %v1458
        %v1523 = vmax.f32 %v1299, %v1459
        %v1524 = vmax.f32 %v1300, %v1460
        %v1525 = vmax.f32 %v1301, %v1461
        %v1526 = vmax.f32 %v1302, %v1462
        %v1527 = vmax.f32 %v1303, %v1463
        %v1528 = vmax.f32 %v1304, %v1464
        %v1529 = vmax.f32 %v1305, %v1465
        %v1530 = vmax.f32 %v1306, %v1466
        %v1531 = vmax.f32 %v1307, %v1467
        %v1532 = vmax.f32 %v1308, %v1468
        %v1533 = vmax.f32 %v1309, %v1469
        %v1534 = vmax.f32 %v1310, %v1470
        %v1535 = vmax.f32 %v1311, %v1471
        %v1536 = vmax.f32 %v1312, %v1472
        %v1537 = vmax.f32 %v1313, %v1473
        %v1538 = vmax.f32 %v1314, %v1474
        %v1539 = vmax.f32 %v1315, %v1475
        %v1540 = vmax.f32 %v1316, %v1476
        %v1541 = vmax.f32 %v1317, %v1477
        %v1542 = vmax.f32 %v1318, %v1478
        %v1543 = vmax.f32 %v1319, %v1479
        %v1544 = vmax.f32 %v1320, %v1480
        %v1545 = vmax.f32 %v1321, %v1481
        %v1546 = vmax.f32 %v1322, %v1482
        %v1547 = vmax.f32 %v1323, %v1483
        %v1548 = vmax.f32 %v1324, %v1484
        %v1549 = vmax.f32 %v1325, %v1485
        %v1550 = vmax.f32 %v1326, %v1486
        %v1551 = vmax.f32 %v1327, %v1487
        %v1552 = vmax.f32 %v1328, %v1488
        %v1553 = vmax.f32 %v1329, %v1489
        %v1554 = vpack.c.bf16 %v1492, %v1490
        %v1555 = vpack.c.bf16 %v1493, %v1491
        %v1556 = vpack.c.bf16 %v1496, %v1494
        %v1557 = vpack.c.bf16 %v1497, %v1495
        %v1558 = vpack.c.bf16 %v1500, %v1498
        %v1559 = vpack.c.bf16 %v1501, %v1499
        %v1560 = vpack.c.bf16 %v1504, %v1502
        %v1561 = vpack.c.bf16 %v1505, %v1503
        %v1562 = vpack.c.bf16 %v1508, %v1506
        %v1563 = vpack.c.bf16 %v1509, %v1507
        %v1564 = vpack.c.bf16 %v1512, %v1510
        %v1565 = vpack.c.bf16 %v1513, %v1511
        %v1566 = vpack.c.bf16 %v1516, %v1514
        %v1567 = vpack.c.bf16 %v1517, %v1515
        %v1568 = vpack.c.bf16 %v1520, %v1518
        %v1569 = vpack.c.bf16 %v1521, %v1519
        %v1570 = vpack.c.bf16 %v1524, %v1522
        %v1571 = vpack.c.bf16 %v1525, %v1523
        %v1572 = vpack.c.bf16 %v1528, %v1526
        %v1573 = vpack.c.bf16 %v1529, %v1527
        %v1574 = vpack.c.bf16 %v1532, %v1530
        %v1575 = vpack.c.bf16 %v1533, %v1531
        %v1576 = vpack.c.bf16 %v1536, %v1534
        %v1577 = vpack.c.bf16 %v1537, %v1535
        %v1578 = vpack.c.bf16 %v1540, %v1538
        %v1579 = vpack.c.bf16 %v1541, %v1539
        %v1580 = vpack.c.bf16 %v1544, %v1542
        %v1581 = vpack.c.bf16 %v1545, %v1543
        %v1582 = vpack.c.bf16 %v1548, %v1546
        %v1583 = vpack.c.bf16 %v1549, %v1547
        %v1584 = vpack.c.bf16 %v1552, %v1550
        %v1585 = vpack.c.bf16 %v1553, %v1551
        %v1586 = vld [vmem:[%s3] sm:$0xff]
        %v1587 = vld [vmem:[%s3 + $0x8] sm:$0xff]
        %v1588 = vld [vmem:[%s3 + $0x10] sm:$0xff]
        %v1589 = vld [vmem:[%s3 + $0x18] sm:$0xff]
        %v1590 = vld [vmem:[%s3 + $0x20] sm:$0xff]
        %v1591 = vld [vmem:[%s3 + $0x28] sm:$0xff]
        %v1592 = vld [vmem:[%s3 + $0x30] sm:$0xff]
        %v1593 = vld [vmem:[%s3 + $0x38] sm:$0xff]
        %v1594 = vld [vmem:[%s3 + $0x40] sm:$0xff]
        %v1595 = vld [vmem:[%s3 + $0x48] sm:$0xff]
        %v1596 = vld [vmem:[%s3 + $0x50] sm:$0xff]
        %v1597 = vld [vmem:[%s3 + $0x58] sm:$0xff]
        %v1598 = vld [vmem:[%s3 + $0x60] sm:$0xff]
        %v1599 = vld [vmem:[%s3 + $0x68] sm:$0xff]
        %v1600 = vld [vmem:[%s3 + $0x70] sm:$0xff]
        %v1601 = vld [vmem:[%s3 + $0x78] sm:$0xff]
        %v1602 = vld [vmem:[%s4] sm:$0xff]
        %v1603 = vld [vmem:[%s4 + $0x8] sm:$0xff]
        %v1604 = vld [vmem:[%s4 + $0x10] sm:$0xff]
        %v1605 = vld [vmem:[%s4 + $0x18] sm:$0xff]
        %v1606 = vld [vmem:[%s4 + $0x20] sm:$0xff]
        %v1607 = vld [vmem:[%s4 + $0x28] sm:$0xff]
        %v1608 = vld [vmem:[%s4 + $0x30] sm:$0xff]
        %v1609 = vld [vmem:[%s4 + $0x38] sm:$0xff]
        %v1610 = vld [vmem:[%s4 + $0x40] sm:$0xff]
        %v1611 = vld [vmem:[%s4 + $0x48] sm:$0xff]
        %v1612 = vld [vmem:[%s4 + $0x50] sm:$0xff]
        %v1613 = vld [vmem:[%s4 + $0x58] sm:$0xff]
        %v1614 = vld [vmem:[%s4 + $0x60] sm:$0xff]
        %v1615 = vld [vmem:[%s4 + $0x68] sm:$0xff]
        %v1616 = vld [vmem:[%s4 + $0x70] sm:$0xff]
        %v1617 = vld [vmem:[%s4 + $0x78] sm:$0xff]
        %1619 = vset.pattern.permute.xlu0 0
        %1620 = vperm.xlu0 %1619, %v1602
        %v1621 = vpop.permute.xlu0 %1620
        %1624 = vset.pattern.permute.xlu0 0
        %1625 = vperm.xlu0 %1624, %v1603
        %v1626 = vpop.permute.xlu0 %1625
        %1629 = vset.pattern.permute.xlu0 0
        %1630 = vperm.xlu0 %1629, %v1604
        %v1631 = vpop.permute.xlu0 %1630
        %1634 = vset.pattern.permute.xlu0 0
        %1635 = vperm.xlu0 %1634, %v1605
        %v1636 = vpop.permute.xlu0 %1635
        %1639 = vset.pattern.permute.xlu0 0
        %1640 = vperm.xlu0 %1639, %v1606
        %v1641 = vpop.permute.xlu0 %1640
        %1644 = vset.pattern.permute.xlu0 0
        %1645 = vperm.xlu0 %1644, %v1607
        %v1646 = vpop.permute.xlu0 %1645
        %1649 = vset.pattern.permute.xlu0 0
        %1650 = vperm.xlu0 %1649, %v1608
        %v1651 = vpop.permute.xlu0 %1650
        %1654 = vset.pattern.permute.xlu0 0
        %1655 = vperm.xlu0 %1654, %v1609
        %v1656 = vpop.permute.xlu0 %1655
        %1659 = vset.pattern.permute.xlu0 0
        %1660 = vperm.xlu0 %1659, %v1610
        %v1661 = vpop.permute.xlu0 %1660
        %1664 = vset.pattern.permute.xlu0 0
        %1665 = vperm.xlu0 %1664, %v1611
        %v1666 = vpop.permute.xlu0 %1665
        %1669 = vset.pattern.permute.xlu0 0
        %1670 = vperm.xlu0 %1669, %v1612
        %v1671 = vpop.permute.xlu0 %1670
        %1674 = vset.pattern.permute.xlu0 0
        %1675 = vperm.xlu0 %1674, %v1613
        %v1676 = vpop.permute.xlu0 %1675
        %1679 = vset.pattern.permute.xlu0 0
        %1680 = vperm.xlu0 %1679, %v1614
        %v1681 = vpop.permute.xlu0 %1680
        %1684 = vset.pattern.permute.xlu0 0
        %1685 = vperm.xlu0 %1684, %v1615
        %v1686 = vpop.permute.xlu0 %1685
        %1689 = vset.pattern.permute.xlu0 0
        %1690 = vperm.xlu0 %1689, %v1616
        %v1691 = vpop.permute.xlu0 %1690
        %1694 = vset.pattern.permute.xlu0 0
        %1695 = vperm.xlu0 %1694, %v1617
        %v1696 = vpop.permute.xlu0 %1695
        %v1714 = vunpack.c.l.b16 %v1586
        %v1715 = vunpack.c.h.b16 %v1586
        %v1716 = vunpack.c.l.b16 %v1587
        %v1717 = vunpack.c.h.b16 %v1587
        %v1718 = vunpack.c.l.b16 %v1588
        %v1719 = vunpack.c.h.b16 %v1588
        %v1720 = vunpack.c.l.b16 %v1589
        %v1721 = vunpack.c.h.b16 %v1589
        %v1722 = vunpack.c.l.b16 %v1590
        %v1723 = vunpack.c.h.b16 %v1590
        %v1724 = vunpack.c.l.b16 %v1591
        %v1725 = vunpack.c.h.b16 %v1591
        %v1726 = vunpack.c.l.b16 %v1592
        %v1727 = vunpack.c.h.b16 %v1592
        %v1728 = vunpack.c.l.b16 %v1593
        %v1729 = vunpack.c.h.b16 %v1593
        %v1730 = vunpack.c.l.b16 %v1594
        %v1731 = vunpack.c.h.b16 %v1594
        %v1732 = vunpack.c.l.b16 %v1595
        %v1733 = vunpack.c.h.b16 %v1595
        %v1734 = vunpack.c.l.b16 %v1596
        %v1735 = vunpack.c.h.b16 %v1596
        %v1736 = vunpack.c.l.b16 %v1597
        %v1737 = vunpack.c.h.b16 %v1597
        %v1738 = vunpack.c.l.b16 %v1598
        %v1739 = vunpack.c.h.b16 %v1598
        %v1740 = vunpack.c.l.b16 %v1599
        %v1741 = vunpack.c.h.b16 %v1599
        %v1742 = vunpack.c.l.b16 %v1600
        %v1743 = vunpack.c.h.b16 %v1600
        %v1744 = vunpack.c.l.b16 %v1601
        %v1745 = vunpack.c.h.b16 %v1601
        %v1746 = vpack.c.b16 %v1716, %v1714
        %v1747 = vpack.c.b16 %v1717, %v1715
        %v1748 = vpack.c.b16 %v1720, %v1718
        %v1749 = vpack.c.b16 %v1721, %v1719
        %v1750 = vpack.c.b16 %v1724, %v1722
        %v1751 = vpack.c.b16 %v1725, %v1723
        %v1752 = vpack.c.b16 %v1728, %v1726
        %v1753 = vpack.c.b16 %v1729, %v1727
        %v1754 = vpack.c.b16 %v1732, %v1730
        %v1755 = vpack.c.b16 %v1733, %v1731
        %v1756 = vpack.c.b16 %v1736, %v1734
        %v1757 = vpack.c.b16 %v1737, %v1735
        %v1758 = vpack.c.b16 %v1740, %v1738
        %v1759 = vpack.c.b16 %v1741, %v1739
        %v1760 = vpack.c.b16 %v1744, %v1742
        %v1761 = vpack.c.b16 %v1745, %v1743
        %1778 = vmatpush.bf16.msra.mxu0 %v1568
        %1779 = vmatpush.bf16.msra.mxu0 %v1566
        %1780 = vmatpush.bf16.msra.mxu0 %v1564
        %1781 = vmatpush.bf16.msra.mxu0 %v1562
        %1782 = vmatpush.bf16.msra.mxu0 %v1560
        %1783 = vmatpush.bf16.msra.mxu0 %v1558
        %1784 = vmatpush.bf16.msra.mxu0 %v1556
        %1785 = vmatpush.bf16.msra.mxu0 %v1554
        %1786 = vmatmul.bf16.gmra.mxu0 %v1746
        %v1787 = vpop.f32.mrf.mxu0
        %v1788 = vadd.f32 %v1621, %v1787
        %v1789 = vpop.f32.mrf.mxu0
        %v1790 = vadd.f32 %v1626, %v1789
        %1791 = vmatmul.bf16.gmra.mxu0 %v1748
        %v1792 = vpop.f32.mrf.mxu0
        %v1793 = vadd.f32 %v1631, %v1792
        %v1794 = vpop.f32.mrf.mxu0
        %v1795 = vadd.f32 %v1636, %v1794
        %1796 = vmatmul.bf16.gmra.mxu0 %v1750
        %v1797 = vpop.f32.mrf.mxu0
        %v1798 = vadd.f32 %v1641, %v1797
        %v1799 = vpop.f32.mrf.mxu0
        %v1800 = vadd.f32 %v1646, %v1799
        %1801 = vmatmul.bf16.gmra.mxu0 %v1752
        %v1802 = vpop.f32.mrf.mxu0
        %v1803 = vadd.f32 %v1651, %v1802
        %v1804 = vpop.f32.mrf.mxu0
        %v1805 = vadd.f32 %v1656, %v1804
        %1806 = vmatmul.bf16.gmra.mxu0 %v1754
        %v1807 = vpop.f32.mrf.mxu0
        %v1808 = vadd.f32 %v1661, %v1807
        %v1809 = vpop.f32.mrf.mxu0
        %v1810 = vadd.f32 %v1666, %v1809
        %1811 = vmatmul.bf16.gmra.mxu0 %v1756
        %v1812 = vpop.f32.mrf.mxu0
        %v1813 = vadd.f32 %v1671, %v1812
        %v1814 = vpop.f32.mrf.mxu0
        %v1815 = vadd.f32 %v1676, %v1814
        %1816 = vmatmul.bf16.gmra.mxu0 %v1758
        %v1817 = vpop.f32.mrf.mxu0
        %v1818 = vadd.f32 %v1681, %v1817
        %v1819 = vpop.f32.mrf.mxu0
        %v1820 = vadd.f32 %v1686, %v1819
        %1821 = vmatmul.bf16.gmra.mxu0 %v1760
        %v1822 = vpop.f32.mrf.mxu0
        %v1823 = vadd.f32 %v1691, %v1822
        %v1824 = vpop.f32.mrf.mxu0
        %v1825 = vadd.f32 %v1696, %v1824
        %1826 = vdwg.mxu0
        %1827 = vmatpush.bf16.msra.mxu0 %v1584
        %1828 = vmatpush.bf16.msra.mxu0 %v1582
        %1829 = vmatpush.bf16.msra.mxu0 %v1580
        %1830 = vmatpush.bf16.msra.mxu0 %v1578
        %1831 = vmatpush.bf16.msra.mxu0 %v1576
        %1832 = vmatpush.bf16.msra.mxu0 %v1574
        %1833 = vmatpush.bf16.msra.mxu0 %v1572
        %1834 = vmatpush.bf16.msra.mxu0 %v1570
        %1835 = vmatmul.bf16.gmra.mxu0 %v1747
        %v1836 = vpop.f32.mrf.mxu0
        %v1837 = vadd.f32 %v1788, %v1836
        %v1838 = vpop.f32.mrf.mxu0
        %v1839 = vadd.f32 %v1790, %v1838
        %1840 = vmatmul.bf16.gmra.mxu0 %v1749
        %v1841 = vpop.f32.mrf.mxu0
        %v1842 = vadd.f32 %v1793, %v1841
        %v1843 = vpop.f32.mrf.mxu0
        %v1844 = vadd.f32 %v1795, %v1843
        %1845 = vmatmul.bf16.gmra.mxu0 %v1751
        %v1846 = vpop.f32.mrf.mxu0
        %v1847 = vadd.f32 %v1798, %v1846
        %v1848 = vpop.f32.mrf.mxu0
        %v1849 = vadd.f32 %v1800, %v1848
        %1850 = vmatmul.bf16.gmra.mxu0 %v1753
        %v1851 = vpop.f32.mrf.mxu0
        %v1852 = vadd.f32 %v1803, %v1851
        %v1853 = vpop.f32.mrf.mxu0
        %v1854 = vadd.f32 %v1805, %v1853
        %1855 = vmatmul.bf16.gmra.mxu0 %v1755
        %v1856 = vpop.f32.mrf.mxu0
        %v1857 = vadd.f32 %v1808, %v1856
        %v1858 = vpop.f32.mrf.mxu0
        %v1859 = vadd.f32 %v1810, %v1858
        %1860 = vmatmul.bf16.gmra.mxu0 %v1757
        %v1861 = vpop.f32.mrf.mxu0
        %v1862 = vadd.f32 %v1813, %v1861
        %v1863 = vpop.f32.mrf.mxu0
        %v1864 = vadd.f32 %v1815, %v1863
        %1865 = vmatmul.bf16.gmra.mxu0 %v1759
        %v1866 = vpop.f32.mrf.mxu0
        %v1867 = vadd.f32 %v1818, %v1866
        %v1868 = vpop.f32.mrf.mxu0
        %v1869 = vadd.f32 %v1820, %v1868
        %1870 = vmatmul.bf16.gmra.mxu0 %v1761
        %v1871 = vpop.f32.mrf.mxu0
        %v1872 = vadd.f32 %v1823, %v1871
        %v1873 = vpop.f32.mrf.mxu0
        %v1874 = vadd.f32 %v1825, %v1873
        %1875 = vdwg.mxu0
        %1876 = vmatpush.bf16.msra.mxu0 %v1569
        %1877 = vmatpush.bf16.msra.mxu0 %v1567
        %1878 = vmatpush.bf16.msra.mxu0 %v1565
        %1879 = vmatpush.bf16.msra.mxu0 %v1563
        %1880 = vmatpush.bf16.msra.mxu0 %v1561
        %1881 = vmatpush.bf16.msra.mxu0 %v1559
        %1882 = vmatpush.bf16.msra.mxu0 %v1557
        %1883 = vmatpush.bf16.msra.mxu0 %v1555
        %1884 = vmatmul.bf16.gmra.mxu0 %v1746
        %v1885 = vpop.f32.mrf.mxu0
        %v1886 = vadd.f32 %v1621, %v1885
        %v1887 = vpop.f32.mrf.mxu0
        %v1888 = vadd.f32 %v1626, %v1887
        %1889 = vmatmul.bf16.gmra.mxu0 %v1748
        %v1890 = vpop.f32.mrf.mxu0
        %v1891 = vadd.f32 %v1631, %v1890
        %v1892 = vpop.f32.mrf.mxu0
        %v1893 = vadd.f32 %v1636, %v1892
        %1894 = vmatmul.bf16.gmra.mxu0 %v1750
        %v1895 = vpop.f32.mrf.mxu0
        %v1896 = vadd.f32 %v1641, %v1895
        %v1897 = vpop.f32.mrf.mxu0
        %v1898 = vadd.f32 %v1646, %v1897
        %1899 = vmatmul.bf16.gmra.mxu0 %v1752
        %v1900 = vpop.f32.mrf.mxu0
        %v1901 = vadd.f32 %v1651, %v1900
        %v1902 = vpop.f32.mrf.mxu0
        %v1903 = vadd.f32 %v1656, %v1902
        %1904 = vmatmul.bf16.gmra.mxu0 %v1754
        %v1905 = vpop.f32.mrf.mxu0
        %v1906 = vadd.f32 %v1661, %v1905
        %v1907 = vpop.f32.mrf.mxu0
        %v1908 = vadd.f32 %v1666, %v1907
        %1909 = vmatmul.bf16.gmra.mxu0 %v1756
        %v1910 = vpop.f32.mrf.mxu0
        %v1911 = vadd.f32 %v1671, %v1910
        %v1912 = vpop.f32.mrf.mxu0
        %v1913 = vadd.f32 %v1676, %v1912
        %1914 = vmatmul.bf16.gmra.mxu0 %v1758
        %v1915 = vpop.f32.mrf.mxu0
        %v1916 = vadd.f32 %v1681, %v1915
        %v1917 = vpop.f32.mrf.mxu0
        %v1918 = vadd.f32 %v1686, %v1917
        %1919 = vmatmul.bf16.gmra.mxu0 %v1760
        %v1920 = vpop.f32.mrf.mxu0
        %v1921 = vadd.f32 %v1691, %v1920
        %v1922 = vpop.f32.mrf.mxu0
        %v1923 = vadd.f32 %v1696, %v1922
        %1924 = vdwg.mxu0
        %1925 = vmatpush.bf16.msra.mxu0 %v1585
        %1926 = vmatpush.bf16.msra.mxu0 %v1583
        %1927 = vmatpush.bf16.msra.mxu0 %v1581
        %1928 = vmatpush.bf16.msra.mxu0 %v1579
        %1929 = vmatpush.bf16.msra.mxu0 %v1577
        %1930 = vmatpush.bf16.msra.mxu0 %v1575
        %1931 = vmatpush.bf16.msra.mxu0 %v1573
        %1932 = vmatpush.bf16.msra.mxu0 %v1571
        %1933 = vmatmul.bf16.gmra.mxu0 %v1747
        %v1934 = vpop.f32.mrf.mxu0
        %v1935 = vadd.f32 %v1886, %v1934
        %v1936 = vpop.f32.mrf.mxu0
        %v1937 = vadd.f32 %v1888, %v1936
        %1938 = vmatmul.bf16.gmra.mxu0 %v1749
        %v1939 = vpop.f32.mrf.mxu0
        %v1940 = vadd.f32 %v1891, %v1939
        %v1941 = vpop.f32.mrf.mxu0
        %v1942 = vadd.f32 %v1893, %v1941
        %1943 = vmatmul.bf16.gmra.mxu0 %v1751
        %v1944 = vpop.f32.mrf.mxu0
        %v1945 = vadd.f32 %v1896, %v1944
        %v1946 = vpop.f32.mrf.mxu0
        %v1947 = vadd.f32 %v1898, %v1946
        %1948 = vmatmul.bf16.gmra.mxu0 %v1753
        %v1949 = vpop.f32.mrf.mxu0
        %v1950 = vadd.f32 %v1901, %v1949
        %v1951 = vpop.f32.mrf.mxu0
        %v1952 = vadd.f32 %v1903, %v1951
        %1953 = vmatmul.bf16.gmra.mxu0 %v1755
        %v1954 = vpop.f32.mrf.mxu0
        %v1955 = vadd.f32 %v1906, %v1954
        %v1956 = vpop.f32.mrf.mxu0
        %v1957 = vadd.f32 %v1908, %v1956
        %1958 = vmatmul.bf16.gmra.mxu0 %v1757
        %v1959 = vpop.f32.mrf.mxu0
        %v1960 = vadd.f32 %v1911, %v1959
        %v1961 = vpop.f32.mrf.mxu0
        %v1962 = vadd.f32 %v1913, %v1961
        %1963 = vmatmul.bf16.gmra.mxu0 %v1759
        %v1964 = vpop.f32.mrf.mxu0
        %v1965 = vadd.f32 %v1916, %v1964
        %v1966 = vpop.f32.mrf.mxu0
        %v1967 = vadd.f32 %v1918, %v1966
        %1968 = vmatmul.bf16.gmra.mxu0 %v1761
        %v1969 = vpop.f32.mrf.mxu0
        %v1970 = vadd.f32 %v1921, %v1969
        %v1971 = vpop.f32.mrf.mxu0
        %v1972 = vadd.f32 %v1923, %v1971
        %1973 = vdwg.mxu0
        %v1974 = vmul.f32 %v1837, 0.2
        %v1975 = vmul.f32 %v1935, 0.2
        %v1976 = vmul.f32 %v1839, 0.2
        %v1977 = vmul.f32 %v1937, 0.2
        %v1978 = vmul.f32 %v1842, 0.2
        %v1979 = vmul.f32 %v1940, 0.2
        %v1980 = vmul.f32 %v1844, 0.2
        %v1981 = vmul.f32 %v1942, 0.2
        %v1982 = vmul.f32 %v1847, 0.2
        %v1983 = vmul.f32 %v1945, 0.2
        %v1984 = vmul.f32 %v1849, 0.2
        %v1985 = vmul.f32 %v1947, 0.2
        %v1986 = vmul.f32 %v1852, 0.2
        %v1987 = vmul.f32 %v1950, 0.2
        %v1988 = vmul.f32 %v1854, 0.2
        %v1989 = vmul.f32 %v1952, 0.2
        %v1990 = vmul.f32 %v1857, 0.2
        %v1991 = vmul.f32 %v1955, 0.2
        %v1992 = vmul.f32 %v1859, 0.2
        %v1993 = vmul.f32 %v1957, 0.2
        %v1994 = vmul.f32 %v1862, 0.2
        %v1995 = vmul.f32 %v1960, 0.2
        %v1996 = vmul.f32 %v1864, 0.2
        %v1997 = vmul.f32 %v1962, 0.2
        %v1998 = vmul.f32 %v1867, 0.2
        %v1999 = vmul.f32 %v1965, 0.2
        %v2000 = vmul.f32 %v1869, 0.2
        %v2001 = vmul.f32 %v1967, 0.2
        %v2002 = vmul.f32 %v1872, 0.2
        %v2003 = vmul.f32 %v1970, 0.2
        %v2004 = vmul.f32 %v1874, 0.2
        %v2005 = vmul.f32 %v1972, 0.2
        %v2006 = vmax.f32 %v1837, %v1974
        %v2007 = vmax.f32 %v1935, %v1975
        %v2008 = vmax.f32 %v1839, %v1976
        %v2009 = vmax.f32 %v1937, %v1977
        %v2010 = vmax.f32 %v1842, %v1978
        %v2011 = vmax.f32 %v1940, %v1979
        %v2012 = vmax.f32 %v1844, %v1980
        %v2013 = vmax.f32 %v1942, %v1981
        %v2014 = vmax.f32 %v1847, %v1982
        %v2015 = vmax.f32 %v1945, %v1983
        %v2016 = vmax.f32 %v1849, %v1984
        %v2017 = vmax.f32 %v1947, %v1985
        %v2018 = vmax.f32 %v1852, %v1986
        %v2019 = vmax.f32 %v1950, %v1987
        %v2020 = vmax.f32 %v1854, %v1988
        %v2021 = vmax.f32 %v1952, %v1989
        %v2022 = vmax.f32 %v1857, %v1990
        %v2023 = vmax.f32 %v1955, %v1991
        %v2024 = vmax.f32 %v1859, %v1992
        %v2025 = vmax.f32 %v1957, %v1993
        %v2026 = vmax.f32 %v1862, %v1994
        %v2027 = vmax.f32 %v1960, %v1995
        %v2028 = vmax.f32 %v1864, %v1996
        %v2029 = vmax.f32 %v1962, %v1997
        %v2030 = vmax.f32 %v1867, %v1998
        %v2031 = vmax.f32 %v1965, %v1999
        %v2032 = vmax.f32 %v1869, %v2000
        %v2033 = vmax.f32 %v1967, %v2001
        %v2034 = vmax.f32 %v1872, %v2002
        %v2035 = vmax.f32 %v1970, %v2003
        %v2036 = vmax.f32 %v1874, %v2004
        %v2037 = vmax.f32 %v1972, %v2005
        %v2038 = vld [vmem:[%s5] sm:$0xff]
        %v2039 = vld [vmem:[%s5 + $0x8] sm:$0xff]
        %v2040 = vld [vmem:[%s5 + $0x10] sm:$0xff]
        %v2041 = vld [vmem:[%s5 + $0x18] sm:$0xff]
        %v2042 = vld [vmem:[%s5 + $0x20] sm:$0xff]
        %v2043 = vld [vmem:[%s5 + $0x28] sm:$0xff]
        %v2044 = vld [vmem:[%s5 + $0x30] sm:$0xff]
        %v2045 = vld [vmem:[%s5 + $0x38] sm:$0xff]
        %v2046 = vld [vmem:[%s5 + $0x40] sm:$0xff]
        %v2047 = vld [vmem:[%s5 + $0x48] sm:$0xff]
        %v2048 = vld [vmem:[%s5 + $0x50] sm:$0xff]
        %v2049 = vld [vmem:[%s5 + $0x58] sm:$0xff]
        %v2050 = vld [vmem:[%s5 + $0x60] sm:$0xff]
        %v2051 = vld [vmem:[%s5 + $0x68] sm:$0xff]
        %v2052 = vld [vmem:[%s5 + $0x70] sm:$0xff]
        %v2053 = vld [vmem:[%s5 + $0x78] sm:$0xff]
        %2055 = vset.pattern.permute.xlu0 0
        %2056 = vperm.xlu0 %2055, %v2038
        %v2057 = vpop.permute.xlu0 %2056
        %2060 = vset.pattern.permute.xlu0 0
        %2061 = vperm.xlu0 %2060, %v2039
        %v2062 = vpop.permute.xlu0 %2061
        %2065 = vset.pattern.permute.xlu0 0
        %2066 = vperm.xlu0 %2065, %v2040
        %v2067 = vpop.permute.xlu0 %2066
        %2070 = vset.pattern.permute.xlu0 0
        %2071 = vperm.xlu0 %2070, %v2041
        %v2072 = vpop.permute.xlu0 %2071
        %2075 = vset.pattern.permute.xlu0 0
        %2076 = vperm.xlu0 %2075, %v2042
        %v2077 = vpop.permute.xlu0 %2076
        %2080 = vset.pattern.permute.xlu0 0
        %2081 = vperm.xlu0 %2080, %v2043
        %v2082 = vpop.permute.xlu0 %2081
        %2085 = vset.pattern.permute.xlu0 0
        %2086 = vperm.xlu0 %2085, %v2044
        %v2087 = vpop.permute.xlu0 %2086
        %2090 = vset.pattern.permute.xlu0 0
        %2091 = vperm.xlu0 %2090, %v2045
        %v2092 = vpop.permute.xlu0 %2091
        %2095 = vset.pattern.permute.xlu0 0
        %2096 = vperm.xlu0 %2095, %v2046
        %v2097 = vpop.permute.xlu0 %2096
        %2100 = vset.pattern.permute.xlu0 0
        %2101 = vperm.xlu0 %2100, %v2047
        %v2102 = vpop.permute.xlu0 %2101
        %2105 = vset.pattern.permute.xlu0 0
        %2106 = vperm.xlu0 %2105, %v2048
        %v2107 = vpop.permute.xlu0 %2106
        %2110 = vset.pattern.permute.xlu0 0
        %2111 = vperm.xlu0 %2110, %v2049
        %v2112 = vpop.permute.xlu0 %2111
        %2115 = vset.pattern.permute.xlu0 0
        %2116 = vperm.xlu0 %2115, %v2050
        %v2117 = vpop.permute.xlu0 %2116
        %2120 = vset.pattern.permute.xlu0 0
        %2121 = vperm.xlu0 %2120, %v2051
        %v2122 = vpop.permute.xlu0 %2121
        %2125 = vset.pattern.permute.xlu0 0
        %2126 = vperm.xlu0 %2125, %v2052
        %v2127 = vpop.permute.xlu0 %2126
        %2130 = vset.pattern.permute.xlu0 0
        %2131 = vperm.xlu0 %2130, %v2053
        %v2132 = vpop.permute.xlu0 %2131
        %v2134 = vmul.f32 %v2006, %v2057
        %v2135 = vmul.f32 %v2007, %v2057
        %v2136 = vmul.f32 %v2008, %v2062
        %v2137 = vmul.f32 %v2009, %v2062
        %v2138 = vmul.f32 %v2010, %v2067
        %v2139 = vmul.f32 %v2011, %v2067
        %v2140 = vmul.f32 %v2012, %v2072
        %v2141 = vmul.f32 %v2013, %v2072
        %v2142 = vmul.f32 %v2014, %v2077
        %v2143 = vmul.f32 %v2015, %v2077
        %v2144 = vmul.f32 %v2016, %v2082
        %v2145 = vmul.f32 %v2017, %v2082
        %v2146 = vmul.f32 %v2018, %v2087
        %v2147 = vmul.f32 %v2019, %v2087
        %v2148 = vmul.f32 %v2020, %v2092
        %v2149 = vmul.f32 %v2021, %v2092
        %v2150 = vmul.f32 %v2022, %v2097
        %v2151 = vmul.f32 %v2023, %v2097
        %v2152 = vmul.f32 %v2024, %v2102
        %v2153 = vmul.f32 %v2025, %v2102
        %v2154 = vmul.f32 %v2026, %v2107
        %v2155 = vmul.f32 %v2027, %v2107
        %v2156 = vmul.f32 %v2028, %v2112
        %v2157 = vmul.f32 %v2029, %v2112
        %v2158 = vmul.f32 %v2030, %v2117
        %v2159 = vmul.f32 %v2031, %v2117
        %v2160 = vmul.f32 %v2032, %v2122
        %v2161 = vmul.f32 %v2033, %v2122
        %v2162 = vmul.f32 %v2034, %v2127
        %v2163 = vmul.f32 %v2035, %v2127
        %v2164 = vmul.f32 %v2036, %v2132
        %v2165 = vmul.f32 %v2037, %v2132
        %v2166 = vadd.f32 %v2134, %v2136
        %v2167 = vadd.f32 %v2166, %v2138
        %v2168 = vadd.f32 %v2167, %v2140
        %v2169 = vadd.f32 %v2168, %v2142
        %v2170 = vadd.f32 %v2169, %v2144
        %v2171 = vadd.f32 %v2170, %v2146
        %v2172 = vadd.f32 %v2171, %v2148
        %v2173 = vadd.f32 %v2172, %v2150
        %v2174 = vadd.f32 %v2173, %v2152
        %v2175 = vadd.f32 %v2174, %v2154
        %v2176 = vadd.f32 %v2175, %v2156
        %v2177 = vadd.f32 %v2176, %v2158
        %v2178 = vadd.f32 %v2177, %v2160
        %v2179 = vadd.f32 %v2178, %v2162
        %v2180 = vadd.f32 %v2179, %v2164
        %v2181 = vrot.slane %v2180, 4
        %v2182 = vadd.f32 %v2180, %v2181
        %v2183 = vrot.slane %v2182, 2
        %v2184 = vadd.f32 %v2182, %v2183
        %v2185 = vrot.slane %v2184, 1
        %v2186 = vadd.f32 %v2184, %v2185
        %v2187 = vadd.f32 %v2135, %v2137
        %v2188 = vadd.f32 %v2187, %v2139
        %v2189 = vadd.f32 %v2188, %v2141
        %v2190 = vadd.f32 %v2189, %v2143
        %v2191 = vadd.f32 %v2190, %v2145
        %v2192 = vadd.f32 %v2191, %v2147
        %v2193 = vadd.f32 %v2192, %v2149
        %v2194 = vadd.f32 %v2193, %v2151
        %v2195 = vadd.f32 %v2194, %v2153
        %v2196 = vadd.f32 %v2195, %v2155
        %v2197 = vadd.f32 %v2196, %v2157
        %v2198 = vadd.f32 %v2197, %v2159
        %v2199 = vadd.f32 %v2198, %v2161
        %v2200 = vadd.f32 %v2199, %v2163
        %v2201 = vadd.f32 %v2200, %v2165
        %v2202 = vrot.slane %v2201, 4
        %v2203 = vadd.f32 %v2201, %v2202
        %v2204 = vrot.slane %v2203, 2
        %v2205 = vadd.f32 %v2203, %v2204
        %v2206 = vrot.slane %v2205, 1
        %v2207 = vadd.f32 %v2205, %v2206
        %v2208 = vld [vmem:[#allocation2] sm:$0x1]
        %2210 = vset.pattern.permute.xlu0 0
        %2211 = vperm.xlu0 %2210, %v2208
        %v2212 = vpop.permute.xlu0 %2211
        %v2214 = vperm.slane %v2212, 0
        %v2215 = vadd.f32 %v2186, %v2214
        %v2216 = vadd.f32 %v2207, %v2214
        %v2217 = vxor.u32 %v2215, 2147483648
        %v2218 = vxor.u32 %v2216, 2147483648
        %v2219 = vmul.f32 %v2217, 1.442695
        %v2220 = vpow.pop %v2219
        %v2221 = vmul.f32 %v2218, 1.442695
        %v2222 = vpow.pop %v2221
        %v2223 = vadd.f32 %v2220, 1.0
        %v2224 = vadd.f32 %v2222, 1.0
        %v2225 = vrcp.pop %v2223
        %v2226 = vmul.f32 %v2223, %v2225
        %v2227 = vsub.f32 1.0, %v2226
        %v2228 = vmul.f32 %v2225, %v2227
        %v2229 = vadd.f32 %v2225, %v2228
        %vm2230 = vweird.f32 %v2223
        %vm2231 = vweird.f32 %v2225
        %vm2232 = vmor %vm2230, %vm2231
        %v2233 = vsel %vm2232, %v2225, %v2229
        %v2234 = vand.u32 2147483647, %v2223
        %vm2235 = vcmp.eq.f32.partialorder %v2234, 8.507059e+37
        %v2236 = vand.u32 %v2223, 2147483648
        %v2237 = vor.u32 1.1754944e-38, %v2236
        %v2238 = vsel %vm2235, %v2237, %v2233
        %v2239 = vmul.f32 1.0, %v2238
        %v2240 = vrcp.pop %v2224
        %v2241 = vmul.f32 %v2224, %v2240
        %v2242 = vsub.f32 1.0, %v2241
        %v2243 = vmul.f32 %v2240, %v2242
        %v2244 = vadd.f32 %v2240, %v2243
        %vm2245 = vweird.f32 %v2224
        %vm2246 = vweird.f32 %v2240
        %vm2247 = vmor %vm2245, %vm2246
        %v2248 = vsel %vm2247, %v2240, %v2244
        %v2249 = vand.u32 2147483647, %v2224
        %vm2250 = vcmp.eq.f32.partialorder %v2249, 8.507059e+37
        %v2251 = vand.u32 %v2224, 2147483648
        %v2252 = vor.u32 1.1754944e-38, %v2251
        %v2253 = vsel %vm2250, %v2252, %v2248
        %v2254 = vmul.f32 1.0, %v2253
        %v2257 = vrot.slane %v2254, 7
        %vm2258 = vcmask 1040384
        %v2259 = vsel %vm2258, %v2239, %v2257
        %v2261 = vlaneseq
        %vm2262 = vcmp.ge.s32.totalorder %v2261, 0
        %vm2263 = vcmp.lt.s32.totalorder %v2261, 256
        %vm2264 = vmand %vm2262, %vm2263
        %2265 = vst.msk [vmem:[%s274] sm:$0x3] %vm2264, %v2259
        %s2266 = sand.u32 %s183, 1
        %s2267 = scalar_lea.sflag [#allocation4], %s2266
        %s2268 = sand.u32 %s183, 1
        %s2269 = smul.addr %s2268, 2
        %s2270 = scalar_lea.vmem [#allocation3], %s2269
        // Predicated region
        $region49: #{discriminator_forward.1} parent=47 // pred_check
          %p2271 = pneg %p193
        $region50: #{discriminator_forward.1} parent=47 // pred_check_branch
          %2273 = sbr.rel (%p2271) target = $region52
        $region51: #{discriminator_forward.1} parent=47 // pred_region
          %s2274 = smul.u32 2, %s23
          %2276 = vsyncadd %s2267, 0
          %s2277 = scalar_lea.hbm %s7, %s2274
          %s2279 = sshll.u32 %s2270, 4
          %s2280 = int_to_ptr.vmem [resolvable:$true] %s2279
          %s2281 = sshll.u32 %s2277, 4
          %s2282 = int_to_ptr.hbm [resolvable:$true] %s2281
          %2284 = dma.vmem_to_hbm [thread:$0]  %s2280, 32, %s2282, %s2267
        $region52: #{discriminator_forward.1} parent=47 // pred_fallthru
          _
      $region48: #{discriminator_forward.1} parent=5 // pred_fallthru
        _
      %p2285 = scmp.le.s32.totalorder 2, %s18
      // Predicated region
      $region53: #{discriminator_forward.1} parent=5 // pred_check
        %p2286 = pneg %p2285
      $region54: #{discriminator_forward.1} parent=5 // pred_check_branch
        %2288 = sbr.rel (%p2286) target = $region56
      $region55: #{discriminator_forward.1} parent=5 // pred_region
        %s2289 = ssub.s32 %s18, 2
        // Predicated region
        $region57: #{discriminator_forward.1} parent=55 // pred_check
          %p2290 = pneg %p199
        $region58: #{discriminator_forward.1} parent=55 // pred_check_branch
          %2292 = sbr.rel (%p2290) target = $region60
        $region59: #{discriminator_forward.1} parent=55 // pred_region
          %s2293 = sand.u32 %s184, 1
          %s2294 = scalar_lea.sflag [#allocation4], %s2293
          %s2295 = sand.u32 %s184, 1
          %s2296 = smul.addr %s2295, 2
          %s2297 = scalar_lea.vmem [#allocation3], %s2296
          %2299 = dma.done %s2294, 32
        $region60: #{discriminator_forward.1} parent=55 // pred_fallthru
          _
      $region56: #{discriminator_forward.1} parent=5 // pred_fallthru
        _
    $region6: #{discriminator_forward.1} parent=1 // loop_footer
      %s22 = sadd.s32 1, %s18
    $region7: #{discriminator_forward.1} parent=1 // loop_footer_branch
      %17 = sbr.rel target = $region3
    $region8: #{discriminator_forward.1} parent=1 // loop_exit
      _
    %2300 = vsyncpa [#allocation4], 1
    %s2301 = scalar_lea.sflag [#allocation4], 1
    %2302 = vsyncpa %s2301, 1

</llo_original>
